<compile_context>
chip_gen: v6e
topology: v6e:2x2x1
jax: 0.10.0
libtpu: 0.0.40
codegen_flags: <defaults>
</compile_context>

<pallas_src>
import functools

import jax
import jax.numpy as jnp
from jax.experimental import pallas as pl
from jax.experimental.pallas import tpu as pltpu

LN_EPS = 1e-5    # nn.LayerNorm default eps
BN_EPS = 1e-5    # nn.BatchNorm1d default eps (eval mode, running stats)
ASP_EPS = 1e-12  # SpeechBrain AttentiveStatisticsPooling eps
NEG_BIG = -1e30


def _layer_norm_rows(x, g, b):
    mu = jnp.mean(x, axis=-1, keepdims=True)
    var = jnp.mean((x - mu) ** 2, axis=-1, keepdims=True)
    return (x - mu) * jax.lax.rsqrt(var + LN_EPS) * g + b


def xeus_head_kernel(x_ref,
                     ln1_g, ln1_b,
                     w_tdnn0, w_tdnn1, w_tdnn2, b_tdnn,
                     bn_scale, bn_shift,
                     w_attn, b_attn,
                     hln_g, hln_b,
                     w_head, b_head,
                     out_ref,
                     gsum, gsumsq, m_sc, l_sc, s1_sc, s2_sc,
                     *, T_valid, tT, needs_mask, use_fast_eup):
    p = pl.program_id(1)       # pass: 0 = global stats, 1 = attention + pool
    t = pl.program_id(2)       # time chunk
    nT = pl.num_programs(2)

    # ---- per-batch-element accumulator init ----
    @pl.when(jnp.logical_and(p == 0, t == 0))
    def _():
        gsum[...] = jnp.zeros_like(gsum)
        gsumsq[...] = jnp.zeros_like(gsumsq)

    @pl.when(jnp.logical_and(p == 1, t == 0))
    def _():
        m_sc[...] = jnp.full_like(m_sc, NEG_BIG)
        l_sc[...] = jnp.zeros_like(l_sc)
        s1_sc[...] = jnp.zeros_like(s1_sc)
        s2_sc[...] = jnp.zeros_like(s2_sc)

    # ---- self.layer_norm on this time chunk (row-local; recomputed per pass) ----
    x = x_ref[0].astype(jnp.float32)                        # (tT, C)
    xn = _layer_norm_rows(x, ln1_g[...], ln1_b[...])        # (tT, C) f32

    if needs_mask:
        row = t * tT + jax.lax.broadcasted_iota(jnp.int32, (tT, 1), 0)
        mask = row < T_valid                                # (tT, 1) bool
    else:
        mask = None

    # ---- pass 0: global (uniform-weight) statistics of xn over time ----
    @pl.when(p == 0)
    def _():
        xnm = jnp.where(mask, xn, 0.0) if needs_mask else xn
        gsum[...] += jnp.sum(xnm, axis=0, keepdims=True)
        gsumsq[...] += jnp.sum(xnm * xnm, axis=0, keepdims=True)

    # ---- pass 1: TDNN + attention scores, online-softmax weighted stats ----
    @pl.when(p == 1)
    def _():
        inv_T = jnp.float32(1.0 / T_valid)
        gmean = gsum[...] * inv_T                                       # (1, C)
        gvar = gsumsq[...] * inv_T - gmean * gmean
        gstd = jnp.sqrt(jnp.maximum(gvar, ASP_EPS))                     # (1, C)

        # TDNNBlock (1x1 conv -> ReLU -> eval BatchNorm) with the (T, 3C)
        # concat removed algebraically:
        #   concat([xn, gmean, gstd], -1) @ W == xn @ W0 + gmean @ W1 + gstd @ W2
        xn_bf = xn.astype(jnp.bfloat16)                                 # MXU operand
        a = jnp.dot(xn_bf, w_tdnn0[...], preferred_element_type=jnp.float32)
        a = a + jnp.dot(gmean.astype(jnp.bfloat16), w_tdnn1[...],
                        preferred_element_type=jnp.float32)
        a = a + jnp.dot(gstd.astype(jnp.bfloat16), w_tdnn2[...],
                        preferred_element_type=jnp.float32)
        a = a + b_tdnn[...]                                             # (tT, A)
        a = jnp.maximum(a, 0.0)
        a = a * bn_scale[...] + bn_shift[...]
        a = jnp.tanh(a)

        # attention 1x1 conv -> streaming softmax over time (per channel)
        scores = jnp.dot(a.astype(jnp.bfloat16), w_attn[...],
                         preferred_element_type=jnp.float32) + b_attn[...]  # (tT, C)

        sc_for_max = jnp.where(mask, scores, NEG_BIG) if needs_mask else scores
        chunk_max = jnp.max(sc_for_max, axis=0, keepdims=True)          # (1, C)
        m_old = m_sc[...]
        m_new = jnp.maximum(m_old, chunk_max)
        alpha = jnp.exp(m_old - m_new)                                  # (1, C)

        if use_fast_eup:
            # v6e/v7x: bf16 EUP exp (~2x element rate); accumulation stays f32.
            e = jnp.exp((scores - m_new).astype(jnp.bfloat16)).astype(jnp.float32)
        else:
            # v5e: no bf16 VPU/EUP -> keep elementwise math f32.
            e = jnp.exp(scores - m_new)
        if needs_mask:
            e = jnp.where(mask, e, 0.0)

        l_new = alpha * l_sc[...] + jnp.sum(e, axis=0, keepdims=True)
        exn = e * xn
        s1_new = alpha * s1_sc[...] + jnp.sum(exn, axis=0, keepdims=True)
        s2_new = alpha * s2_sc[...] + jnp.sum(exn * xn, axis=0, keepdims=True)

        m_sc[...] = m_new
        l_sc[...] = l_new
        s1_sc[...] = s1_new
        s2_sc[...] = s2_new

        # ---- finalize: pooled stats -> self.head (LayerNorm + Linear) ----
        @pl.when(t == nT - 1)
        def _():
            mean = s1_new / l_new                                       # (1, C)
            var_w = s2_new / l_new - mean * mean
            std = jnp.sqrt(jnp.maximum(var_w, ASP_EPS))                 # (1, C)
            pooled = jnp.concatenate([mean, std], axis=-1)              # (1, 2C)

            pn = _layer_norm_rows(pooled, hln_g[...], hln_b[...])
            emb = jnp.dot(pn, w_head[...],
                          preferred_element_type=jnp.float32) + b_head[...]  # (1, E_pad)
            out_ref[0] = emb.astype(out_ref.dtype)


_PARAM_ORDER = ["ln1_g", "ln1_b",
                "w_tdnn0", "w_tdnn1", "w_tdnn2", "b_tdnn",
                "bn_scale", "bn_shift",
                "w_attn", "b_attn",
                "hln_g", "hln_b",
                "w_head", "b_head"]


def _tpu_kind():
    try:
        return jax.devices()[0].device_kind.lower()
    except Exception:
        return ""


def _vmem_limit_bytes(tT, C, A, E_pad, params_bytes, kind):
    est = 2 * tT * C * 2            # double-buffered bf16 x chunk
    est += 5 * tT * C * 4           # f32 (tT, C) live set: xn, scores, e, products
    est += 4 * tT * A * 4           # (tT, A) activation temps
    est += 2 * params_bytes
    est += 16 * 8 * C * 4 + 8 * E_pad * 4   # accumulators (sublane-padded) + finalize temps
    est = int(est * 1.3) + (4 << 20)
    # v5e/v6e have 128 MiB physical VMEM; v7x only 64 MiB -> cap tighter.
    cap = (100 << 20) if ("v5" in kind or "v6" in kind) else (56 << 20)
    return max(min(est, cap), 32 << 20)


def xeus_finetune_head(x, params, emb_dim, *, time_block=256):
    """x: (B, T, C) = concatenation of selected XEUS layer features."""
    B, T, C = x.shape
    E_pad = params["w_head"].shape[-1]
    A = params["w_tdnn0"].shape[-1]

    kind = _tpu_kind()
    use_fast_eup = "v5" not in kind     # bf16 exp only where the EUP supports bf16

    # Time-chunk size: multiple of 8 (sublane), no larger than needed.
    tT = max(8, (time_block // 8) * 8)
    tT = min(tT, ((T + 7) // 8) * 8)
    nT = -(-T // tT)
    T_pad = nT * tT

    # Stream x in bf16: halves the HBM-bound read and the input double buffer.
    x_bf = x.astype(jnp.bfloat16)
    if T_pad != T:
        x_bf = jnp.pad(x_bf, ((0, 0), (0, T_pad - T), (0, 0)))

    param_arrays = [params[k] for k in _PARAM_ORDER]
    params_bytes = sum(int(a.size) * a.dtype.itemsize for a in param_arrays)

    def full_spec(arr):
        return pl.BlockSpec(arr.shape, lambda b, p, t: (0, 0))

    in_specs = ([pl.BlockSpec((1, tT, C), lambda b, p, t: (b, t, 0))]
                + [full_spec(a) for a in param_arrays])

    kernel = functools.partial(
        xeus_head_kernel, T_valid=T, tT=tT,
        needs_mask=(T_pad != T), use_fast_eup=use_fast_eup)

    out = pl.pallas_call(
        kernel,
        out_shape=jax.ShapeDtypeStruct((B, 1, E_pad), jnp.float32),
        grid=(B, 2, nT),
        in_specs=in_specs,
        out_specs=pl.BlockSpec((1, 1, E_pad), lambda b, p, t: (b, 0, 0)),
        scratch_shapes=[pltpu.VMEM((1, C), jnp.float32)] * 6,
        compiler_params=pltpu.CompilerParams(
            dimension_semantics=("parallel", "arbitrary", "arbitrary"),
            vmem_limit_bytes=_vmem_limit_bytes(tT, C, A, E_pad, params_bytes, kind)),
    )(x_bf, *param_arrays)
    return out[:, 0, :emb_dim]


def init_params(key, C, att_ch, emb_dim):
    """Deterministic synthetic parameters (shapes follow the PyTorch module)."""
    emb_pad = ((emb_dim + 127) // 128) * 128
    k1, k2, k3 = jax.random.split(key, 3)
    p = {}
    # nn.LayerNorm(C)
    p["ln1_g"] = jnp.ones((1, C), jnp.float32)
    p["ln1_b"] = jnp.zeros((1, C), jnp.float32)
    # ASP TDNNBlock: Conv1d(3C -> att_ch, k=1); row-split for the concat-free matmul
    w_tdnn = (jax.random.normal(k1, (3 * C, att_ch)) * 0.02).astype(jnp.float32)
    p["w_tdnn0"] = w_tdnn[:C].astype(jnp.bfloat16)           # multiplies xn
    p["w_tdnn1"] = w_tdnn[C:2 * C].astype(jnp.bfloat16)      # multiplies gmean
    p["w_tdnn2"] = w_tdnn[2 * C:].astype(jnp.bfloat16)       # multiplies gstd
    p["b_tdnn"] = jnp.zeros((1, att_ch), jnp.float32)
    # BatchNorm1d(att_ch), eval mode with default running stats (folded)
    gamma = jnp.ones((1, att_ch), jnp.float32)
    beta = jnp.zeros((1, att_ch), jnp.float32)
    run_mean = jnp.zeros((1, att_ch), jnp.float32)
    run_var = jnp.ones((1, att_ch), jnp.float32)
    scale = gamma / jnp.sqrt(run_var + BN_EPS)
    p["bn_scale"] = scale
    p["bn_shift"] = beta - run_mean * scale
    # ASP attention Conv1d(att_ch -> C, k=1)
    p["w_attn"] = (jax.random.normal(k2, (att_ch, C)) * 0.02).astype(jnp.bfloat16)
    p["b_attn"] = jnp.zeros((1, C), jnp.float32)
    # head: LayerNorm(2C) + Linear(2C, emb_dim), output lane-padded to 128
    p["hln_g"] = jnp.ones((1, 2 * C), jnp.float32)
    p["hln_b"] = jnp.zeros((1, 2 * C), jnp.float32)
    w_head = (jax.random.normal(k3, (2 * C, emb_dim)) * 0.02).astype(jnp.float32)
    p["w_head"] = jnp.zeros((2 * C, emb_pad), jnp.float32).at[:, :emb_dim].set(w_head)
    p["b_head"] = jnp.zeros((1, emb_pad), jnp.float32)
    return p


def reference_head(x, params, emb_dim):
    """Pure-JAX f32 reference of LayerNorm -> ASP -> head (module semantics)."""
    f32 = lambda a: a.astype(jnp.float32)
    x = f32(x)
    mu = jnp.mean(x, axis=-1, keepdims=True)
    var = jnp.mean((x - mu) ** 2, axis=-1, keepdims=True)
    xn = (x - mu) / jnp.sqrt(var + LN_EPS) * params["ln1_g"][0] + params["ln1_b"][0]
    gmean = jnp.mean(xn, axis=1, keepdims=True)
    gstd = jnp.sqrt(jnp.maximum(jnp.mean((xn - gmean) ** 2, axis=1, keepdims=True), ASP_EPS))
    attn_in = jnp.concatenate(
        [xn, jnp.broadcast_to(gmean, xn.shape), jnp.broadcast_to(gstd, xn.shape)], axis=-1)
    w_tdnn = jnp.concatenate(
        [f32(params["w_tdnn0"]), f32(params["w_tdnn1"]), f32(params["w_tdnn2"])], axis=0)
    a = attn_in @ w_tdnn + params["b_tdnn"][0]
    a = jnp.maximum(a, 0.0) * params["bn_scale"][0] + params["bn_shift"][0]
    a = jnp.tanh(a)
    scores = a @ f32(params["w_attn"]) + params["b_attn"][0]
    attn = jax.nn.softmax(scores, axis=1)
    mean = jnp.sum(attn * xn, axis=1, keepdims=True)
    std = jnp.sqrt(jnp.maximum(jnp.sum(attn * (xn - mean) ** 2, axis=1, keepdims=True), ASP_EPS))
    pooled = jnp.concatenate([mean, std], axis=-1)[:, 0, :]          # (B, 2C)
    pm = jnp.mean(pooled, axis=-1, keepdims=True)
    pv = jnp.mean((pooled - pm) ** 2, axis=-1, keepdims=True)
    pn = (pooled - pm) / jnp.sqrt(pv + LN_EPS) * params["hln_g"][0] + params["hln_b"][0]
    emb = pn @ params["w_head"] + params["b_head"][0]
    return emb[:, :emb_dim]


if __name__ == "__main__":
    # Small synthetic shapes consistent with the module's forward
    B, T, D = 2, 20, 64                # batch, time, per-layer feature dim (1024 in real XEUS)
    n_enc_layers = 4
    selected_layers = [1, 3]           # self.selected_layers
    num_blocks = len(selected_layers)
    C = D * num_blocks                 # concatenated channels
    att_ch = 128                       # ASP attention_channels (SpeechBrain default)
    emb_dim = 8

    key = jax.random.PRNGKey(0)
    k_enc, _ = jax.random.split(key)

    # Synthesized per-layer XEUS encoder outputs: (num_layers, B, T, D)
    encoder_outputs = jax.random.normal(k_enc, (n_enc_layers, B, T, D), dtype=jnp.float32)

    # torch.cat(selected_features, dim=-1)  (glue, done in plain JAX)
    selected = [encoder_outputs[i] for i in selected_layers]
    x = jnp.concatenate(selected, axis=-1)          # (B, T, C)

    params = init_params(jax.random.PRNGKey(42), C, att_ch, emb_dim)

    # time_block=8 -> 3 time chunks (exercises the streaming / masked-tail path)
    emb = xeus_finetune_head(x, params, emb_dim, time_block=8)   # 'embeddings': (B, emb_dim)
    jax.block_until_ready(emb)
    assert emb.shape == (B, emb_dim)

    ref = reference_head(x, params, emb_dim)
    assert bool(jnp.allclose(emb, ref, atol=5e-2, rtol=5e-2)), "kernel/reference mismatch"
    print("KERNEL_OK")
</pallas_src>

<mosaic_0001>
module attributes {stable_mosaic.version = 11 : i64} {
  func.func @xeus_head_kernel(%arg0: i32, %arg1: i32, %arg2: i32, %arg3: memref<1x8x128xbf16, #tpu.memory_space<vmem>>, %arg4: memref<1x128xf32, #tpu.memory_space<vmem>>, %arg5: memref<1x128xf32, #tpu.memory_space<vmem>>, %arg6: memref<128x128xbf16, #tpu.memory_space<vmem>>, %arg7: memref<128x128xbf16, #tpu.memory_space<vmem>>, %arg8: memref<128x128xbf16, #tpu.memory_space<vmem>>, %arg9: memref<1x128xf32, #tpu.memory_space<vmem>>, %arg10: memref<1x128xf32, #tpu.memory_space<vmem>>, %arg11: memref<1x128xf32, #tpu.memory_space<vmem>>, %arg12: memref<128x128xbf16, #tpu.memory_space<vmem>>, %arg13: memref<1x128xf32, #tpu.memory_space<vmem>>, %arg14: memref<1x256xf32, #tpu.memory_space<vmem>>, %arg15: memref<1x256xf32, #tpu.memory_space<vmem>>, %arg16: memref<256x128xf32, #tpu.memory_space<vmem>>, %arg17: memref<1x128xf32, #tpu.memory_space<vmem>>, %arg18: memref<1x1x128xf32, #tpu.memory_space<vmem>>, %arg19: memref<1x128xf32, #tpu.memory_space<vmem>>, %arg20: memref<1x128xf32, #tpu.memory_space<vmem>>, %arg21: memref<1x128xf32, #tpu.memory_space<vmem>>, %arg22: memref<1x128xf32, #tpu.memory_space<vmem>>, %arg23: memref<1x128xf32, #tpu.memory_space<vmem>>, %arg24: memref<1x128xf32, #tpu.memory_space<vmem>>) attributes {dimension_semantics = [#tpu.dimension_semantics<parallel>, #tpu.dimension_semantics<arbitrary>, #tpu.dimension_semantics<arbitrary>], iteration_bounds = array<i64: 2, 2, 3>, scalar_prefetch = 0 : i64, scratch_operands = 6 : i64, tpu.core_type = #tpu.core_type<tc>, window_params = [{transform_indices = @transform_0, window_bounds = array<i64: 1, 8, 128>}, {pipeline_mode = #tpu.pipeline_mode<synchronous>, transform_indices = @transform_1, window_bounds = array<i64: 1, 128>}, {pipeline_mode = #tpu.pipeline_mode<synchronous>, transform_indices = @transform_2, window_bounds = array<i64: 1, 128>}, {pipeline_mode = #tpu.pipeline_mode<synchronous>, transform_indices = @transform_3, window_bounds = array<i64: 128, 128>}, {pipeline_mode = #tpu.pipeline_mode<synchronous>, transform_indices = @transform_4, window_bounds = array<i64: 128, 128>}, {pipeline_mode = #tpu.pipeline_mode<synchronous>, transform_indices = @transform_5, window_bounds = array<i64: 128, 128>}, {pipeline_mode = #tpu.pipeline_mode<synchronous>, transform_indices = @transform_6, window_bounds = array<i64: 1, 128>}, {pipeline_mode = #tpu.pipeline_mode<synchronous>, transform_indices = @transform_7, window_bounds = array<i64: 1, 128>}, {pipeline_mode = #tpu.pipeline_mode<synchronous>, transform_indices = @transform_8, window_bounds = array<i64: 1, 128>}, {pipeline_mode = #tpu.pipeline_mode<synchronous>, transform_indices = @transform_9, window_bounds = array<i64: 128, 128>}, {pipeline_mode = #tpu.pipeline_mode<synchronous>, transform_indices = @transform_10, window_bounds = array<i64: 1, 128>}, {pipeline_mode = #tpu.pipeline_mode<synchronous>, transform_indices = @transform_11, window_bounds = array<i64: 1, 256>}, {pipeline_mode = #tpu.pipeline_mode<synchronous>, transform_indices = @transform_12, window_bounds = array<i64: 1, 256>}, {pipeline_mode = #tpu.pipeline_mode<synchronous>, transform_indices = @transform_13, window_bounds = array<i64: 256, 128>}, {pipeline_mode = #tpu.pipeline_mode<synchronous>, transform_indices = @transform_14, window_bounds = array<i64: 1, 128>}, {transform_indices = @transform_15, window_bounds = array<i64: 1, 1, 128>}]} {
    %c0_i32 = arith.constant 0 : i32
    %0 = arith.cmpi eq, %arg1, %c0_i32 : i32
    %c0_i32_0 = arith.constant 0 : i32
    %1 = arith.cmpi eq, %arg2, %c0_i32_0 : i32
    %2 = arith.andi %0, %1 : i1
    %3 = arith.extui %2 : i1 to i32
    %c0_i32_1 = arith.constant 0 : i32
    %4 = arith.cmpi ne, %3, %c0_i32_1 : i32
    scf.if %4 {
      %cst_18 = arith.constant 0.000000e+00 : f32
      %49 = vector.broadcast %cst_18 : f32 to vector<1x128xf32>
      %c0_19 = arith.constant 0 : index
      %c0_20 = arith.constant 0 : index
      %50 = vector.load %arg19[%c0_19, %c0_20] : memref<1x128xf32, #tpu.memory_space<vmem>>, vector<1x128xf32>
      tpu.vector_store %arg19[%c0_19, %c0_20], %49 {strides = array<i32>} : memref<1x128xf32, #tpu.memory_space<vmem>>, vector<1x128xf32>,
      %cst_21 = arith.constant 0.000000e+00 : f32
      %51 = vector.broadcast %cst_21 : f32 to vector<1x128xf32>
      %c0_22 = arith.constant 0 : index
      %c0_23 = arith.constant 0 : index
      %52 = vector.load %arg20[%c0_22, %c0_23] : memref<1x128xf32, #tpu.memory_space<vmem>>, vector<1x128xf32>
      tpu.vector_store %arg20[%c0_22, %c0_23], %51 {strides = array<i32>} : memref<1x128xf32, #tpu.memory_space<vmem>>, vector<1x128xf32>,
    } else {
    }
    %c1_i32 = arith.constant 1 : i32
    %5 = arith.cmpi eq, %arg1, %c1_i32 : i32
    %c0_i32_2 = arith.constant 0 : i32
    %6 = arith.cmpi eq, %arg2, %c0_i32_2 : i32
    %7 = arith.andi %5, %6 : i1
    %8 = arith.extui %7 : i1 to i32
    %c0_i32_3 = arith.constant 0 : i32
    %9 = arith.cmpi ne, %8, %c0_i32_3 : i32
    scf.if %9 {
      %cst_18 = arith.constant -1.000000e+30 : f32
      %49 = vector.broadcast %cst_18 : f32 to vector<1x128xf32>
      %c0_19 = arith.constant 0 : index
      %c0_20 = arith.constant 0 : index
      %50 = vector.load %arg21[%c0_19, %c0_20] : memref<1x128xf32, #tpu.memory_space<vmem>>, vector<1x128xf32>
      tpu.vector_store %arg21[%c0_19, %c0_20], %49 {strides = array<i32>} : memref<1x128xf32, #tpu.memory_space<vmem>>, vector<1x128xf32>,
      %cst_21 = arith.constant 0.000000e+00 : f32
      %51 = vector.broadcast %cst_21 : f32 to vector<1x128xf32>
      %c0_22 = arith.constant 0 : index
      %c0_23 = arith.constant 0 : index
      %52 = vector.load %arg22[%c0_22, %c0_23] : memref<1x128xf32, #tpu.memory_space<vmem>>, vector<1x128xf32>
      tpu.vector_store %arg22[%c0_22, %c0_23], %51 {strides = array<i32>} : memref<1x128xf32, #tpu.memory_space<vmem>>, vector<1x128xf32>,
      %cst_24 = arith.constant 0.000000e+00 : f32
      %53 = vector.broadcast %cst_24 : f32 to vector<1x128xf32>
      %c0_25 = arith.constant 0 : index
      %c0_26 = arith.constant 0 : index
      %54 = vector.load %arg23[%c0_25, %c0_26] : memref<1x128xf32, #tpu.memory_space<vmem>>, vector<1x128xf32>
      tpu.vector_store %arg23[%c0_25, %c0_26], %53 {strides = array<i32>} : memref<1x128xf32, #tpu.memory_space<vmem>>, vector<1x128xf32>,
      %cst_27 = arith.constant 0.000000e+00 : f32
      %55 = vector.broadcast %cst_27 : f32 to vector<1x128xf32>
      %c0_28 = arith.constant 0 : index
      %c0_29 = arith.constant 0 : index
      %56 = vector.load %arg24[%c0_28, %c0_29] : memref<1x128xf32, #tpu.memory_space<vmem>>, vector<1x128xf32>
      tpu.vector_store %arg24[%c0_28, %c0_29], %55 {strides = array<i32>} : memref<1x128xf32, #tpu.memory_space<vmem>>, vector<1x128xf32>,
    } else {
    }
    %c0 = arith.constant 0 : index
    %c0_4 = arith.constant 0 : index
    %c0_5 = arith.constant 0 : index
    %10 = vector.load %arg3[%c0, %c0_4, %c0_5] : memref<1x8x128xbf16, #tpu.memory_space<vmem>>, vector<1x8x128xbf16>
    %11 = vector.shape_cast %10 : vector<1x8x128xbf16> to vector<8x128xbf16>
    %12 = arith.extf %11 : vector<8x128xbf16> to vector<8x128xf32>
    %c0_6 = arith.constant 0 : index
    %c0_7 = arith.constant 0 : index
    %13 = vector.load %arg4[%c0_6, %c0_7] : memref<1x128xf32, #tpu.memory_space<vmem>>, vector<1x128xf32>
    %c0_8 = arith.constant 0 : index
    %c0_9 = arith.constant 0 : index
    %14 = vector.load %arg5[%c0_8, %c0_9] : memref<1x128xf32, #tpu.memory_space<vmem>>, vector<1x128xf32>
    %cst = arith.constant dense<0.000000e+00> : vector<8xf32>
    %15 = vector.multi_reduction <add>, %12, %cst [1] : vector<8x128xf32> to vector<8xf32>
    %16 = vector.shape_cast %15 : vector<8xf32> to vector<8x1xf32>
    %cst_10 = arith.constant 1.280000e+02 : f32
    %17 = vector.broadcast %cst_10 : f32 to vector<8x1xf32>
    %18 = arith.divf %16, %17 : vector<8x1xf32>
    %19 = vector.broadcast %18 : vector<8x1xf32> to vector<8x128xf32>
    %20 = arith.subf %12, %19 : vector<8x128xf32>
    %21 = arith.mulf %20, %20 : vector<8x128xf32>
    %cst_11 = arith.constant dense<0.000000e+00> : vector<8xf32>
    %22 = vector.multi_reduction <add>, %21, %cst_11 [1] : vector<8x128xf32> to vector<8xf32>
    %23 = vector.shape_cast %22 : vector<8xf32> to vector<8x1xf32>
    %cst_12 = arith.constant 1.280000e+02 : f32
    %24 = vector.broadcast %cst_12 : f32 to vector<8x1xf32>
    %25 = arith.divf %23, %24 : vector<8x1xf32>
    %26 = vector.broadcast %18 : vector<8x1xf32> to vector<8x128xf32>
    %27 = arith.subf %12, %26 : vector<8x128xf32>
    %cst_13 = arith.constant 9.99999974E-6 : f32
    %28 = vector.broadcast %cst_13 : f32 to vector<8x1xf32>
    %29 = arith.addf %25, %28 : vector<8x1xf32>
    %30 = math.rsqrt %29 : vector<8x1xf32>
    %31 = vector.broadcast %30 : vector<8x1xf32> to vector<8x128xf32>
    %32 = arith.mulf %27, %31 : vector<8x128xf32>
    %33 = vector.broadcast %13 : vector<1x128xf32> to vector<8x128xf32>
    %34 = arith.mulf %32, %33 : vector<8x128xf32>
    %35 = vector.broadcast %14 : vector<1x128xf32> to vector<8x128xf32>
    %36 = arith.addf %34, %35 : vector<8x128xf32>
    %c8_i32 = arith.constant 8 : i32
    %37 = arith.muli %arg2, %c8_i32 : i32
    %38 = tpu.iota {dimensions = array<i32: 0>} : vector<8x1xi32>
    %39 = vector.broadcast %37 : i32 to vector<8x1xi32>
    %40 = arith.addi %39, %38 : vector<8x1xi32>
    %c20_i32 = arith.constant 20 : i32
    %41 = vector.broadcast %c20_i32 : i32 to vector<8x1xi32>
    %42 = arith.cmpi slt, %40, %41 : vector<8x1xi32>
    %c0_i32_14 = arith.constant 0 : i32
    %43 = arith.cmpi eq, %arg1, %c0_i32_14 : i32
    %44 = arith.extui %43 : i1 to i32
    %c0_i32_15 = arith.constant 0 : i32
    %45 = arith.cmpi ne, %44, %c0_i32_15 : i32
    scf.if %45 {
      %cst_18 = arith.constant 0.000000e+00 : f32
      %49 = vector.shape_cast %42 : vector<8x1xi1> to vector<8x1xi1>
      %50 = vector.broadcast %49 : vector<8x1xi1> to vector<8x128xi1>
      %51 = vector.broadcast %cst_18 : f32 to vector<8x128xf32>
      %52 = arith.select %50, %36, %51 : vector<8x128xi1>, vector<8x128xf32>
      %c0_19 = arith.constant 0 : index
      %c0_20 = arith.constant 0 : index
      %53 = vector.load %arg19[%c0_19, %c0_20] : memref<1x128xf32, #tpu.memory_space<vmem>>, vector<1x128xf32>
      %cst_21 = arith.constant dense<0.000000e+00> : vector<128xf32>
      %54 = vector.multi_reduction <add>, %52, %cst_21 [0] : vector<8x128xf32> to vector<128xf32>
      %55 = vector.shape_cast %54 : vector<128xf32> to vector<1x128xf32>
      %56 = arith.addf %53, %55 : vector<1x128xf32>
      %c0_22 = arith.constant 0 : index
      %c0_23 = arith.constant 0 : index
      %57 = vector.load %arg19[%c0_22, %c0_23] : memref<1x128xf32, #tpu.memory_space<vmem>>, vector<1x128xf32>
      tpu.vector_store %arg19[%c0_22, %c0_23], %56 {strides = array<i32>} : memref<1x128xf32, #tpu.memory_space<vmem>>, vector<1x128xf32>,
      %c0_24 = arith.constant 0 : index
      %c0_25 = arith.constant 0 : index
      %58 = vector.load %arg20[%c0_24, %c0_25] : memref<1x128xf32, #tpu.memory_space<vmem>>, vector<1x128xf32>
      %59 = arith.mulf %52, %52 : vector<8x128xf32>
      %cst_26 = arith.constant dense<0.000000e+00> : vector<128xf32>
      %60 = vector.multi_reduction <add>, %59, %cst_26 [0] : vector<8x128xf32> to vector<128xf32>
      %61 = vector.shape_cast %60 : vector<128xf32> to vector<1x128xf32>
      %62 = arith.addf %58, %61 : vector<1x128xf32>
      %c0_27 = arith.constant 0 : index
      %c0_28 = arith.constant 0 : index
      %63 = vector.load %arg20[%c0_27, %c0_28] : memref<1x128xf32, #tpu.memory_space<vmem>>, vector<1x128xf32>
      tpu.vector_store %arg20[%c0_27, %c0_28], %62 {strides = array<i32>} : memref<1x128xf32, #tpu.memory_space<vmem>>, vector<1x128xf32>,
    } else {
    }
    %c1_i32_16 = arith.constant 1 : i32
    %46 = arith.cmpi eq, %arg1, %c1_i32_16 : i32
    %47 = arith.extui %46 : i1 to i32
    %c0_i32_17 = arith.constant 0 : i32
    %48 = arith.cmpi ne, %47, %c0_i32_17 : i32
    scf.if %48 {
      %c0_18 = arith.constant 0 : index
      %c0_19 = arith.constant 0 : index
      %49 = vector.load %arg19[%c0_18, %c0_19] : memref<1x128xf32, #tpu.memory_space<vmem>>, vector<1x128xf32>
      %cst_20 = arith.constant 5.000000e-02 : f32
      %50 = vector.broadcast %cst_20 : f32 to vector<1x128xf32>
      %51 = arith.mulf %49, %50 : vector<1x128xf32>
      %c0_21 = arith.constant 0 : index
      %c0_22 = arith.constant 0 : index
      %52 = vector.load %arg20[%c0_21, %c0_22] : memref<1x128xf32, #tpu.memory_space<vmem>>, vector<1x128xf32>
      %cst_23 = arith.constant 5.000000e-02 : f32
      %53 = vector.broadcast %cst_23 : f32 to vector<1x128xf32>
      %54 = arith.mulf %52, %53 : vector<1x128xf32>
      %55 = arith.mulf %51, %51 : vector<1x128xf32>
      %56 = arith.subf %54, %55 : vector<1x128xf32>
      %cst_24 = arith.constant 9.99999996E-13 : f32
      %57 = vector.broadcast %cst_24 : f32 to vector<1x128xf32>
      %58 = arith.maximumf %56, %57 : vector<1x128xf32>
      %59 = math.sqrt %58 : vector<1x128xf32>
      %60 = arith.truncf %36 : vector<8x128xf32> to vector<8x128xbf16>
      %c0_25 = arith.constant 0 : index
      %c0_26 = arith.constant 0 : index
      %61 = vector.load %arg6[%c0_25, %c0_26] : memref<128x128xbf16, #tpu.memory_space<vmem>>, vector<128x128xbf16>
      %cst_27 = arith.constant dense<0.000000e+00> : vector<8x128xf32>
      %62 = tpu.matmul %60, %61, %cst_27 {dimension_numbers = #tpu.dot_dimension_numbers<[1], [0], [0], [1], [0, 0, 1, 1], [], []>} : vector<8x128xbf16>, vector<128x128xbf16>, vector<8x128xf32> -> vector<8x128xf32>
      %63 = arith.truncf %51 : vector<1x128xf32> to vector<1x128xbf16>
      %c0_28 = arith.constant 0 : index
      %c0_29 = arith.constant 0 : index
      %64 = vector.load %arg7[%c0_28, %c0_29] : memref<128x128xbf16, #tpu.memory_space<vmem>>, vector<128x128xbf16>
      %cst_30 = arith.constant dense<0.000000e+00> : vector<1x128xf32>
      %65 = tpu.matmul %63, %64, %cst_30 {dimension_numbers = #tpu.dot_dimension_numbers<[1], [0], [0], [1], [0, 0, 1, 1], [], []>} : vector<1x128xbf16>, vector<128x128xbf16>, vector<1x128xf32> -> vector<1x128xf32>
      %66 = vector.broadcast %65 : vector<1x128xf32> to vector<8x128xf32>
      %67 = arith.addf %62, %66 : vector<8x128xf32>
      %68 = arith.truncf %59 : vector<1x128xf32> to vector<1x128xbf16>
      %c0_31 = arith.constant 0 : index
      %c0_32 = arith.constant 0 : index
      %69 = vector.load %arg8[%c0_31, %c0_32] : memref<128x128xbf16, #tpu.memory_space<vmem>>, vector<128x128xbf16>
      %cst_33 = arith.constant dense<0.000000e+00> : vector<1x128xf32>
      %70 = tpu.matmul %68, %69, %cst_33 {dimension_numbers = #tpu.dot_dimension_numbers<[1], [0], [0], [1], [0, 0, 1, 1], [], []>} : vector<1x128xbf16>, vector<128x128xbf16>, vector<1x128xf32> -> vector<1x128xf32>
      %71 = vector.broadcast %70 : vector<1x128xf32> to vector<8x128xf32>
      %72 = arith.addf %67, %71 : vector<8x128xf32>
      %c0_34 = arith.constant 0 : index
      %c0_35 = arith.constant 0 : index
      %73 = vector.load %arg9[%c0_34, %c0_35] : memref<1x128xf32, #tpu.memory_space<vmem>>, vector<1x128xf32>
      %74 = vector.broadcast %73 : vector<1x128xf32> to vector<8x128xf32>
      %75 = arith.addf %72, %74 : vector<8x128xf32>
      %cst_36 = arith.constant 0.000000e+00 : f32
      %76 = vector.broadcast %cst_36 : f32 to vector<8x128xf32>
      %77 = arith.maximumf %75, %76 : vector<8x128xf32>
      %c0_37 = arith.constant 0 : index
      %c0_38 = arith.constant 0 : index
      %78 = vector.load %arg10[%c0_37, %c0_38] : memref<1x128xf32, #tpu.memory_space<vmem>>, vector<1x128xf32>
      %79 = vector.broadcast %78 : vector<1x128xf32> to vector<8x128xf32>
      %80 = arith.mulf %77, %79 : vector<8x128xf32>
      %c0_39 = arith.constant 0 : index
      %c0_40 = arith.constant 0 : index
      %81 = vector.load %arg11[%c0_39, %c0_40] : memref<1x128xf32, #tpu.memory_space<vmem>>, vector<1x128xf32>
      %82 = vector.broadcast %81 : vector<1x128xf32> to vector<8x128xf32>
      %83 = arith.addf %80, %82 : vector<8x128xf32>
      %84 = math.tanh %83 : vector<8x128xf32>
      %85 = arith.truncf %84 : vector<8x128xf32> to vector<8x128xbf16>
      %c0_41 = arith.constant 0 : index
      %c0_42 = arith.constant 0 : index
      %86 = vector.load %arg12[%c0_41, %c0_42] : memref<128x128xbf16, #tpu.memory_space<vmem>>, vector<128x128xbf16>
      %cst_43 = arith.constant dense<0.000000e+00> : vector<8x128xf32>
      %87 = tpu.matmul %85, %86, %cst_43 {dimension_numbers = #tpu.dot_dimension_numbers<[1], [0], [0], [1], [0, 0, 1, 1], [], []>} : vector<8x128xbf16>, vector<128x128xbf16>, vector<8x128xf32> -> vector<8x128xf32>
      %c0_44 = arith.constant 0 : index
      %c0_45 = arith.constant 0 : index
      %88 = vector.load %arg13[%c0_44, %c0_45] : memref<1x128xf32, #tpu.memory_space<vmem>>, vector<1x128xf32>
      %89 = vector.broadcast %88 : vector<1x128xf32> to vector<8x128xf32>
      %90 = arith.addf %87, %89 : vector<8x128xf32>
      %cst_46 = arith.constant -1.000000e+30 : f32
      %91 = vector.shape_cast %42 : vector<8x1xi1> to vector<8x1xi1>
      %92 = vector.broadcast %91 : vector<8x1xi1> to vector<8x128xi1>
      %93 = vector.broadcast %cst_46 : f32 to vector<8x128xf32>
      %94 = arith.select %92, %90, %93 : vector<8x128xi1>, vector<8x128xf32>
      %cst_47 = arith.constant dense<0xFF800000> : vector<128xf32>
      %95 = vector.multi_reduction <maximumf>, %94, %cst_47 [0] : vector<8x128xf32> to vector<128xf32>
      %96 = vector.shape_cast %95 : vector<128xf32> to vector<1x128xf32>
      %c0_48 = arith.constant 0 : index
      %c0_49 = arith.constant 0 : index
      %97 = vector.load %arg21[%c0_48, %c0_49] : memref<1x128xf32, #tpu.memory_space<vmem>>, vector<1x128xf32>
      %98 = arith.maximumf %97, %96 : vector<1x128xf32>
      %99 = arith.subf %97, %98 : vector<1x128xf32>
      %100 = math.exp %99 : vector<1x128xf32>
      %101 = vector.broadcast %98 : vector<1x128xf32> to vector<8x128xf32>
      %102 = arith.subf %90, %101 : vector<8x128xf32>
      %103 = arith.truncf %102 : vector<8x128xf32> to vector<8x128xbf16>
      %104 = math.exp %103 : vector<8x128xbf16>
      %105 = arith.extf %104 : vector<8x128xbf16> to vector<8x128xf32>
      %cst_50 = arith.constant 0.000000e+00 : f32
      %106 = vector.shape_cast %42 : vector<8x1xi1> to vector<8x1xi1>
      %107 = vector.broadcast %106 : vector<8x1xi1> to vector<8x128xi1>
      %108 = vector.broadcast %cst_50 : f32 to vector<8x128xf32>
      %109 = arith.select %107, %105, %108 : vector<8x128xi1>, vector<8x128xf32>
      %c0_51 = arith.constant 0 : index
      %c0_52 = arith.constant 0 : index
      %110 = vector.load %arg22[%c0_51, %c0_52] : memref<1x128xf32, #tpu.memory_space<vmem>>, vector<1x128xf32>
      %111 = arith.mulf %100, %110 : vector<1x128xf32>
      %cst_53 = arith.constant dense<0.000000e+00> : vector<128xf32>
      %112 = vector.multi_reduction <add>, %109, %cst_53 [0] : vector<8x128xf32> to vector<128xf32>
      %113 = vector.shape_cast %112 : vector<128xf32> to vector<1x128xf32>
      %114 = arith.addf %111, %113 : vector<1x128xf32>
      %115 = arith.mulf %109, %36 : vector<8x128xf32>
      %c0_54 = arith.constant 0 : index
      %c0_55 = arith.constant 0 : index
      %116 = vector.load %arg23[%c0_54, %c0_55] : memref<1x128xf32, #tpu.memory_space<vmem>>, vector<1x128xf32>
      %117 = arith.mulf %100, %116 : vector<1x128xf32>
      %cst_56 = arith.constant dense<0.000000e+00> : vector<128xf32>
      %118 = vector.multi_reduction <add>, %115, %cst_56 [0] : vector<8x128xf32> to vector<128xf32>
      %119 = vector.shape_cast %118 : vector<128xf32> to vector<1x128xf32>
      %120 = arith.addf %117, %119 : vector<1x128xf32>
      %c0_57 = arith.constant 0 : index
      %c0_58 = arith.constant 0 : index
      %121 = vector.load %arg24[%c0_57, %c0_58] : memref<1x128xf32, #tpu.memory_space<vmem>>, vector<1x128xf32>
      %122 = arith.mulf %100, %121 : vector<1x128xf32>
      %123 = arith.mulf %115, %36 : vector<8x128xf32>
      %cst_59 = arith.constant dense<0.000000e+00> : vector<128xf32>
      %124 = vector.multi_reduction <add>, %123, %cst_59 [0] : vector<8x128xf32> to vector<128xf32>
      %125 = vector.shape_cast %124 : vector<128xf32> to vector<1x128xf32>
      %126 = arith.addf %122, %125 : vector<1x128xf32>
      %c0_60 = arith.constant 0 : index
      %c0_61 = arith.constant 0 : index
      %127 = vector.load %arg21[%c0_60, %c0_61] : memref<1x128xf32, #tpu.memory_space<vmem>>, vector<1x128xf32>
      tpu.vector_store %arg21[%c0_60, %c0_61], %98 {strides = array<i32>} : memref<1x128xf32, #tpu.memory_space<vmem>>, vector<1x128xf32>,
      %c0_62 = arith.constant 0 : index
      %c0_63 = arith.constant 0 : index
      %128 = vector.load %arg22[%c0_62, %c0_63] : memref<1x128xf32, #tpu.memory_space<vmem>>, vector<1x128xf32>
      tpu.vector_store %arg22[%c0_62, %c0_63], %114 {strides = array<i32>} : memref<1x128xf32, #tpu.memory_space<vmem>>, vector<1x128xf32>,
      %c0_64 = arith.constant 0 : index
      %c0_65 = arith.constant 0 : index
      %129 = vector.load %arg23[%c0_64, %c0_65] : memref<1x128xf32, #tpu.memory_space<vmem>>, vector<1x128xf32>
      tpu.vector_store %arg23[%c0_64, %c0_65], %120 {strides = array<i32>} : memref<1x128xf32, #tpu.memory_space<vmem>>, vector<1x128xf32>,
      %c0_66 = arith.constant 0 : index
      %c0_67 = arith.constant 0 : index
      %130 = vector.load %arg24[%c0_66, %c0_67] : memref<1x128xf32, #tpu.memory_space<vmem>>, vector<1x128xf32>
      tpu.vector_store %arg24[%c0_66, %c0_67], %126 {strides = array<i32>} : memref<1x128xf32, #tpu.memory_space<vmem>>, vector<1x128xf32>,
      %c2_i32 = arith.constant 2 : i32
      %131 = arith.cmpi eq, %arg2, %c2_i32 : i32
      %132 = arith.extui %131 : i1 to i32
      %c0_i32_68 = arith.constant 0 : i32
      %133 = arith.cmpi ne, %132, %c0_i32_68 : i32
      scf.if %133 {
        %134 = arith.divf %120, %114 : vector<1x128xf32>
        %135 = arith.divf %126, %114 : vector<1x128xf32>
        %136 = arith.mulf %134, %134 : vector<1x128xf32>
        %137 = arith.subf %135, %136 : vector<1x128xf32>
        %cst_69 = arith.constant 9.99999996E-13 : f32
        %138 = vector.broadcast %cst_69 : f32 to vector<1x128xf32>
        %139 = arith.maximumf %137, %138 : vector<1x128xf32>
        %140 = math.sqrt %139 : vector<1x128xf32>
        %141 = tpu.concatenate %134, %140 in 1 : vector<1x128xf32>, vector<1x128xf32> -> vector<1x256xf32>
        %c0_70 = arith.constant 0 : index
        %c0_71 = arith.constant 0 : index
        %142 = vector.load %arg14[%c0_70, %c0_71] : memref<1x256xf32, #tpu.memory_space<vmem>>, vector<1x256xf32>
        %c0_72 = arith.constant 0 : index
        %c0_73 = arith.constant 0 : index
        %143 = vector.load %arg15[%c0_72, %c0_73] : memref<1x256xf32, #tpu.memory_space<vmem>>, vector<1x256xf32>
        %cst_74 = arith.constant dense<0.000000e+00> : vector<1xf32>
        %144 = vector.multi_reduction <add>, %141, %cst_74 [1] : vector<1x256xf32> to vector<1xf32>
        %145 = vector.shape_cast %144 : vector<1xf32> to vector<1x1xf32>
        %cst_75 = arith.constant 2.560000e+02 : f32
        %146 = vector.broadcast %cst_75 : f32 to vector<1x1xf32>
        %147 = arith.divf %145, %146 : vector<1x1xf32>
        %148 = vector.broadcast %147 : vector<1x1xf32> to vector<1x256xf32>
        %149 = arith.subf %141, %148 : vector<1x256xf32>
        %150 = arith.mulf %149, %149 : vector<1x256xf32>
        %cst_76 = arith.constant dense<0.000000e+00> : vector<1xf32>
        %151 = vector.multi_reduction <add>, %150, %cst_76 [1] : vector<1x256xf32> to vector<1xf32>
        %152 = vector.shape_cast %151 : vector<1xf32> to vector<1x1xf32>
        %cst_77 = arith.constant 2.560000e+02 : f32
        %153 = vector.broadcast %cst_77 : f32 to vector<1x1xf32>
        %154 = arith.divf %152, %153 : vector<1x1xf32>
        %155 = vector.broadcast %147 : vector<1x1xf32> to vector<1x256xf32>
        %156 = arith.subf %141, %155 : vector<1x256xf32>
        %cst_78 = arith.constant 9.99999974E-6 : f32
        %157 = vector.broadcast %cst_78 : f32 to vector<1x1xf32>
        %158 = arith.addf %154, %157 : vector<1x1xf32>
        %159 = math.rsqrt %158 : vector<1x1xf32>
        %160 = vector.broadcast %159 : vector<1x1xf32> to vector<1x256xf32>
        %161 = arith.mulf %156, %160 : vector<1x256xf32>
        %162 = arith.mulf %161, %142 : vector<1x256xf32>
        %163 = arith.addf %162, %143 : vector<1x256xf32>
        %c0_79 = arith.constant 0 : index
        %c0_80 = arith.constant 0 : index
        %164 = vector.load %arg16[%c0_79, %c0_80] : memref<256x128xf32, #tpu.memory_space<vmem>>, vector<256x128xf32>
        %cst_81 = arith.constant dense<0.000000e+00> : vector<1x128xf32>
        %165 = tpu.matmul %163, %164, %cst_81 {dimension_numbers = #tpu.dot_dimension_numbers<[1], [0], [0], [1], [0, 0, 1, 1], [], []>} : vector<1x256xf32>, vector<256x128xf32>, vector<1x128xf32> -> vector<1x128xf32>
        %c0_82 = arith.constant 0 : index
        %c0_83 = arith.constant 0 : index
        %166 = vector.load %arg17[%c0_82, %c0_83] : memref<1x128xf32, #tpu.memory_space<vmem>>, vector<1x128xf32>
        %167 = arith.addf %165, %166 : vector<1x128xf32>
        %c0_84 = arith.constant 0 : index
        %c0_85 = arith.constant 0 : index
        %c0_86 = arith.constant 0 : index
        %168 = vector.load %arg18[%c0_84, %c0_85, %c0_86] : memref<1x1x128xf32, #tpu.memory_space<vmem>>, vector<1x1x128xf32>
        %169 = vector.shape_cast %168 : vector<1x1x128xf32> to vector<1x128xf32>
        %170 = vector.shape_cast %167 : vector<1x128xf32> to vector<1x1x128xf32>
        tpu.vector_store %arg18[%c0_84, %c0_85, %c0_86], %170 {strides = array<i32>} : memref<1x1x128xf32, #tpu.memory_space<vmem>>, vector<1x1x128xf32>,
      } else {
      }
    } else {
    }
    return
  }
  func.func @transform_0(%arg0: i32, %arg1: i32, %arg2: i32) -> (i32, i32, i32) {
    %c0_i32 = arith.constant 0 : i32
    %c0_i32_0 = arith.constant 0 : i32
    return %arg0, %arg2, %c0_i32 : i32, i32, i32
  }
  func.func @transform_1(%arg0: i32, %arg1: i32, %arg2: i32) -> (i32, i32) {
    %c0_i32 = arith.constant 0 : i32
    %c0_i32_0 = arith.constant 0 : i32
    %c0_i32_1 = arith.constant 0 : i32
    return %c0_i32, %c0_i32_0 : i32, i32
  }
  func.func @transform_2(%arg0: i32, %arg1: i32, %arg2: i32) -> (i32, i32) {
    %c0_i32 = arith.constant 0 : i32
    %c0_i32_0 = arith.constant 0 : i32
    %c0_i32_1 = arith.constant 0 : i32
    return %c0_i32, %c0_i32_0 : i32, i32
  }
  func.func @transform_3(%arg0: i32, %arg1: i32, %arg2: i32) -> (i32, i32) {
    %c0_i32 = arith.constant 0 : i32
    %c0_i32_0 = arith.constant 0 : i32
    %c0_i32_1 = arith.constant 0 : i32
    return %c0_i32, %c0_i32_0 : i32, i32
  }
  func.func @transform_4(%arg0: i32, %arg1: i32, %arg2: i32) -> (i32, i32) {
    %c0_i32 = arith.constant 0 : i32
    %c0_i32_0 = arith.constant 0 : i32
    %c0_i32_1 = arith.constant 0 : i32
    return %c0_i32, %c0_i32_0 : i32, i32
  }
  func.func @transform_5(%arg0: i32, %arg1: i32, %arg2: i32) -> (i32, i32) {
    %c0_i32 = arith.constant 0 : i32
    %c0_i32_0 = arith.constant 0 : i32
    %c0_i32_1 = arith.constant 0 : i32
    return %c0_i32, %c0_i32_0 : i32, i32
  }
  func.func @transform_6(%arg0: i32, %arg1: i32, %arg2: i32) -> (i32, i32) {
    %c0_i32 = arith.constant 0 : i32
    %c0_i32_0 = arith.constant 0 : i32
    %c0_i32_1 = arith.constant 0 : i32
    return %c0_i32, %c0_i32_0 : i32, i32
  }
  func.func @transform_7(%arg0: i32, %arg1: i32, %arg2: i32) -> (i32, i32) {
    %c0_i32 = arith.constant 0 : i32
    %c0_i32_0 = arith.constant 0 : i32
    %c0_i32_1 = arith.constant 0 : i32
    return %c0_i32, %c0_i32_0 : i32, i32
  }
  func.func @transform_8(%arg0: i32, %arg1: i32, %arg2: i32) -> (i32, i32) {
    %c0_i32 = arith.constant 0 : i32
    %c0_i32_0 = arith.constant 0 : i32
    %c0_i32_1 = arith.constant 0 : i32
    return %c0_i32, %c0_i32_0 : i32, i32
  }
  func.func @transform_9(%arg0: i32, %arg1: i32, %arg2: i32) -> (i32, i32) {
    %c0_i32 = arith.constant 0 : i32
    %c0_i32_0 = arith.constant 0 : i32
    %c0_i32_1 = arith.constant 0 : i32
    return %c0_i32, %c0_i32_0 : i32, i32
  }
  func.func @transform_10(%arg0: i32, %arg1: i32, %arg2: i32) -> (i32, i32) {
    %c0_i32 = arith.constant 0 : i32
    %c0_i32_0 = arith.constant 0 : i32
    %c0_i32_1 = arith.constant 0 : i32
    return %c0_i32, %c0_i32_0 : i32, i32
  }
  func.func @transform_11(%arg0: i32, %arg1: i32, %arg2: i32) -> (i32, i32) {
    %c0_i32 = arith.constant 0 : i32
    %c0_i32_0 = arith.constant 0 : i32
    %c0_i32_1 = arith.constant 0 : i32
    return %c0_i32, %c0_i32_0 : i32, i32
  }
  func.func @transform_12(%arg0: i32, %arg1: i32, %arg2: i32) -> (i32, i32) {
    %c0_i32 = arith.constant 0 : i32
    %c0_i32_0 = arith.constant 0 : i32
    %c0_i32_1 = arith.constant 0 : i32
    return %c0_i32, %c0_i32_0 : i32, i32
  }
  func.func @transform_13(%arg0: i32, %arg1: i32, %arg2: i32) -> (i32, i32) {
    %c0_i32 = arith.constant 0 : i32
    %c0_i32_0 = arith.constant 0 : i32
    %c0_i32_1 = arith.constant 0 : i32
    return %c0_i32, %c0_i32_0 : i32, i32
  }
  func.func @transform_14(%arg0: i32, %arg1: i32, %arg2: i32) -> (i32, i32) {
    %c0_i32 = arith.constant 0 : i32
    %c0_i32_0 = arith.constant 0 : i32
    %c0_i32_1 = arith.constant 0 : i32
    return %c0_i32, %c0_i32_0 : i32, i32
  }
  func.func @transform_15(%arg0: i32, %arg1: i32, %arg2: i32) -> (i32, i32, i32) {
    %c0_i32 = arith.constant 0 : i32
    %c0_i32_0 = arith.constant 0 : i32
    %c0_i32_1 = arith.constant 0 : i32
    return %arg0, %c0_i32, %c0_i32_0 : i32, i32, i32
  }
}

</mosaic_0001>

<llo_original>
// kernel: tpu_custom_call.1
$region0: #{tpu_custom_call.1}
  #allocation0 [shape = 'u32[]', space=smem, size = 0x4, offset = 0x4, fixed_abs, tag = 'smem constant byte address 0x4 - core index']
  #allocation1 [shape = 'u32[144,128]{1,0:T(1,128)}', space=vmem, size = 0x12000, scoped, tag = 'internal scratch']
  #allocation2 [shape = 'f32[1,128]{1,0:T(1,128)}', space=vmem, size = 0x200, scoped, tag = 'scratch operand']
  #allocation3 [shape = 'f32[1,128]{1,0:T(1,128)}', space=vmem, size = 0x200, scoped, tag = 'scratch operand']
  #allocation4 [shape = 'f32[1,128]{1,0:T(1,128)}', space=vmem, size = 0x200, scoped, tag = 'scratch operand']
  #allocation5 [shape = 'f32[1,128]{1,0:T(1,128)}', space=vmem, size = 0x200, scoped, tag = 'scratch operand']
  #allocation6 [shape = 'f32[1,128]{1,0:T(1,128)}', space=vmem, size = 0x200, scoped, tag = 'scratch operand']
  #allocation7 [shape = 'f32[1,128]{1,0:T(1,128)}', space=vmem, size = 0x200, scoped, tag = 'scratch operand']
  %s0 = inlined_call_operand.hbm [shape: bf16[2,24,128], index: 0, kind: input, shape index: {}]
  %s1 = inlined_call_operand.vmem [shape: f32[1,128], index: 1, kind: input, shape index: {}]
  %s2 = inlined_call_operand.hbm [shape: f32[1,128], index: 2, kind: input, shape index: {}]
  %s3 = inlined_call_operand.hbm [shape: bf16[128,128], index: 3, kind: input, shape index: {}]
  %s4 = inlined_call_operand.hbm [shape: bf16[128,128], index: 4, kind: input, shape index: {}]
  %s5 = inlined_call_operand.hbm [shape: bf16[128,128], index: 5, kind: input, shape index: {}]
  %s6 = inlined_call_operand.vmem [shape: f32[1,128], index: 6, kind: input, shape index: {}]
  %s7 = inlined_call_operand.vmem [shape: f32[1,128], index: 7, kind: input, shape index: {}]
  %s8 = inlined_call_operand.vmem [shape: f32[1,128], index: 8, kind: input, shape index: {}]
  %s9 = inlined_call_operand.hbm [shape: bf16[128,128], index: 9, kind: input, shape index: {}]
  %s10 = inlined_call_operand.vmem [shape: f32[1,128], index: 10, kind: input, shape index: {}]
  %s11 = inlined_call_operand.vmem [shape: f32[1,256], index: 11, kind: input, shape index: {}]
  %s12 = inlined_call_operand.vmem [shape: f32[1,256], index: 12, kind: input, shape index: {}]
  %s13 = inlined_call_operand.hbm [shape: f32[256,128], index: 13, kind: input, shape index: {}]
  %s14 = inlined_call_operand.vmem [shape: f32[1,128], index: 14, kind: input, shape index: {}]
  %s15 = inlined_call_operand.hbm [shape: f32[2,1,128], index: 15, kind: output, shape index: {}]
  %s16 = sld [smem:[#allocation0]]
  $region141: #{tpu_custom_call.1} parent=0
    _
  %s18 = ssub.s32 1, %s16
  %s19 = scalar_select 0, %s18, %s16
  $region1: #{tpu_custom_call.1} parent=0
    #allocation8 [shape = 'u8[4096]{0}', space=vmem, size = 0x1000, scoped, tag = 'input window, operand 0']
    #allocation9 [shape = 's32[2]{0}', space=sflag, size = 0x8, scoped, tag = 'scoped memory for tpu_custom_call.1']
    #allocation10 [shape = 's32[2]{0}', space=sflag, size = 0x8, scoped, tag = 'scoped memory for tpu_custom_call.1']
    #allocation11 [shape = 'u8[512]{0}', space=vmem, size = 0x400, scoped, tag = 'input window, operand 2, single buffered']
    #allocation12 [shape = 's32[1]{0}', space=sflag, size = 0x4, scoped, tag = 'scoped memory for tpu_custom_call.1']
    #allocation13 [shape = 'u8[32768]{0}', space=vmem, size = 0x8000, scoped, tag = 'input window, operand 3, single buffered']
    #allocation14 [shape = 'u8[32768]{0}', space=vmem, size = 0x8000, scoped, tag = 'input window, operand 4, single buffered']
    #allocation15 [shape = 's32[1]{0}', space=sflag, size = 0x4, scoped, tag = 'scoped memory for tpu_custom_call.1']
    #allocation16 [shape = 'u8[32768]{0}', space=vmem, size = 0x8000, scoped, tag = 'input window, operand 5, single buffered']
    #allocation17 [shape = 'u8[32768]{0}', space=vmem, size = 0x8000, scoped, tag = 'input window, operand 9, single buffered']
    #allocation18 [shape = 's32[1]{0}', space=sflag, size = 0x4, scoped, tag = 'scoped memory for tpu_custom_call.1']
    #allocation19 [shape = 'u8[131072]{0}', space=vmem, size = 0x20000, scoped, tag = 'input window, operand 13, single buffered']
    #allocation20 [shape = 'u8[1024]{0}', space=vmem, size = 0x400, scoped, tag = 'output window, operand 0']
    %20 = vsyncpa [#allocation9], 0
    %s21 = scalar_lea.sflag [#allocation9], 1
    %22 = vsyncpa %s21, 0
    %23 = vsyncpa [#allocation12], 0
    %24 = vsyncpa [#allocation15], 0
    %25 = vsyncpa [#allocation18], 0
    %26 = vsyncpa [#allocation10], 0
    %s27 = scalar_lea.sflag [#allocation10], 1
    %28 = vsyncpa %s27, 0
    loop: start=0, step=1, limit=14
    $region2: #{tpu_custom_call.1} parent=1 // loop_pre_header
      _
    $region3: #{tpu_custom_call.1} parent=1 // loop_header
      %s30 = sphi 0, %s34
      %p31 = scmp.ge.s32.totalorder %s30, 14
      %s37 = sphi 0, %s56
      %s38 = sphi 0, %s52
      %s39 = sphi 0, %s48
      %s40 = sphi 0, %s37
      %s41 = sphi 0, %s38
      %s42 = sphi 0, %s39
      %s43 = sphi 0, %s40
      %s44 = sphi 0, %s41
      %s45 = sphi 0, %s42
      %s61 = sphi 0, %s63
      %s64 = sphi 0, %s61
      %s65 = sphi 0, %s64
      %s81 = sphi 0, %s65
      %s85 = sphi 0, %s85
      %s87 = sphi 0, %s85
      %s88 = sphi 0, %s87
      %s102 = sphi 0, %s88
      %s106 = sphi 0, %s106
      %s108 = sphi 0, %s106
      %s109 = sphi 0, %s108
      %s123 = sphi 0, %s109
      %s127 = sphi 0, %s127
      %s129 = sphi 0, %s127
      %s130 = sphi 0, %s129
      %s144 = sphi 0, %s130
      %s148 = sphi 0, %s148
      %s150 = sphi 0, %s148
      %s151 = sphi 0, %s150
      %s165 = sphi 0, %s151
      %s169 = sphi 0, %s169
      %s171 = sphi 0, %s169
      %s172 = sphi 0, %s171
      %s186 = sphi 0, %s172
      %s190 = sphi 0, %s190
      %s192 = sphi 0, %s190
      %s193 = sphi 0, %s192
      %s207 = sphi 0, %s193
      %s211 = sphi 0, %s211
      %s213 = sphi 0, %s211
      %s214 = sphi 0, %s213
      %s228 = sphi 0, %s214
      %s232 = sphi 0, %s232
      %s234 = sphi 0, %s232
      %s235 = sphi 0, %s234
      %s249 = sphi 0, %s235
      %s253 = sphi 0, %s253
      %s255 = sphi 0, %s253
      %s256 = sphi 0, %s255
      %s270 = sphi 0, %s256
      %s274 = sphi 0, %s274
      %s276 = sphi 0, %s274
      %s277 = sphi 0, %s276
      %s291 = sphi 0, %s277
      %s295 = sphi 0, %s295
      %s297 = sphi 0, %s295
      %s298 = sphi 0, %s297
      %s312 = sphi 0, %s298
      %s316 = sphi 0, %s316
      %s318 = sphi 0, %s316
      %s319 = sphi 0, %s318
      %s333 = sphi 0, %s319
      %s337 = sphi 0, %s337
      %s339 = sphi 0, %s337
      %s340 = sphi 0, %s339
      %s354 = sphi 0, %s340
      %s358 = sphi 0, %s358
      %s360 = sphi 0, %s358
      %s361 = sphi 0, %s360
      %s375 = sphi 0, %s361
      %s381 = sphi 0, %s383
      %s384 = sphi 0, %s381
      %s385 = sphi 0, %s384
      %s401 = sphi 0, %s385
    $region4: #{tpu_custom_call.1} parent=1 // loop_header_branch
      %33 = sbr.rel (%p31) target = $region8
    $region5: #{tpu_custom_call.1} parent=1 // loop_body
      %s35 = ssub.s32 %s30, 1
      %s36 = ssub.s32 %s30, 2
      %s46 = sadd.s32 1, %s39
      %p47 = scmp.ge.s32.totalorder %s46, 3
      %s48 = scalar_select %p47, 0, %s46
      %s49 = sadd.s32 1, %s38
      %s50 = scalar_select %p47, %s49, %s38
      %p51 = scmp.ge.s32.totalorder %s50, 2
      %s52 = scalar_select %p51, 0, %s50
      %s53 = sadd.s32 1, %s37
      %s54 = scalar_select %p51, %s53, %s37
      %p55 = scmp.ge.s32.totalorder %s54, 2
      %s56 = scalar_select %p55, 0, %s54
      %s57 = ssub.s32 %s37, %s56
      %s58 = ssub.s32 %s39, %s48
      %s59 = sor.u32 %s57, %s58
      %p60 = scmp.eq.s32.totalorder %s59, 0
      %s62 = sadd.s32 %s61, 1
      %s63 = scalar_select %p60, %s61, %s62
      %p66 = pneg %p60
      %p67 = scmp.eq.s32.totalorder %s30, 11
      %p68 = por %p66, %p67
      %p69 = scmp.ne.s32.totalorder %s61, %s64
      %p70 = scmp.eq.s32.totalorder %s30, 0
      %p71 = por %p69, %p70
      %p72 = scmp.ne.s32.totalorder %s61, %s64
      %p73 = scmp.eq.s32.totalorder %s35, 11
      %p74 = por %p72, %p73
      %p75 = scmp.ne.s32.totalorder %s64, %s65
      %p76 = scmp.eq.s32.totalorder %s35, 0
      %p77 = por %p75, %p76
      %p78 = scmp.ne.s32.totalorder %s64, %s65
      %p79 = scmp.eq.s32.totalorder %s36, 11
      %p80 = por %p78, %p79
      %p82 = scmp.ne.s32.totalorder %s65, %s81
      %p83 = scmp.eq.s32.totalorder %s36, 0
      %p84 = por %p82, %p83
      %s86 = sadd.s32 %s85, 1
      %p89 = scmp.eq.s32.totalorder %s30, 11
      %p90 = scmp.ne.s32.totalorder %s85, %s87
      %p91 = scmp.eq.s32.totalorder %s30, 0
      %p92 = por %p90, %p91
      %p93 = scmp.ne.s32.totalorder %s85, %s87
      %p94 = scmp.eq.s32.totalorder %s35, 11
      %p95 = por %p93, %p94
      %p96 = scmp.ne.s32.totalorder %s87, %s88
      %p97 = scmp.eq.s32.totalorder %s35, 0
      %p98 = por %p96, %p97
      %p99 = scmp.ne.s32.totalorder %s87, %s88
      %p100 = scmp.eq.s32.totalorder %s36, 11
      %p101 = por %p99, %p100
      %p103 = scmp.ne.s32.totalorder %s88, %s102
      %p104 = scmp.eq.s32.totalorder %s36, 0
      %p105 = por %p103, %p104
      %s107 = sadd.s32 %s106, 1
      %p110 = scmp.eq.s32.totalorder %s30, 11
      %p111 = scmp.ne.s32.totalorder %s106, %s108
      %p112 = scmp.eq.s32.totalorder %s30, 0
      %p113 = por %p111, %p112
      %p114 = scmp.ne.s32.totalorder %s106, %s108
      %p115 = scmp.eq.s32.totalorder %s35, 11
      %p116 = por %p114, %p115
      %p117 = scmp.ne.s32.totalorder %s108, %s109
      %p118 = scmp.eq.s32.totalorder %s35, 0
      %p119 = por %p117, %p118
      %p120 = scmp.ne.s32.totalorder %s108, %s109
      %p121 = scmp.eq.s32.totalorder %s36, 11
      %p122 = por %p120, %p121
      %p124 = scmp.ne.s32.totalorder %s109, %s123
      %p125 = scmp.eq.s32.totalorder %s36, 0
      %p126 = por %p124, %p125
      %s128 = sadd.s32 %s127, 1
      %p131 = scmp.eq.s32.totalorder %s30, 11
      %p132 = scmp.ne.s32.totalorder %s127, %s129
      %p133 = scmp.eq.s32.totalorder %s30, 0
      %p134 = por %p132, %p133
      %p135 = scmp.ne.s32.totalorder %s127, %s129
      %p136 = scmp.eq.s32.totalorder %s35, 11
      %p137 = por %p135, %p136
      %p138 = scmp.ne.s32.totalorder %s129, %s130
      %p139 = scmp.eq.s32.totalorder %s35, 0
      %p140 = por %p138, %p139
      %p141 = scmp.ne.s32.totalorder %s129, %s130
      %p142 = scmp.eq.s32.totalorder %s36, 11
      %p143 = por %p141, %p142
      %p145 = scmp.ne.s32.totalorder %s130, %s144
      %p146 = scmp.eq.s32.totalorder %s36, 0
      %p147 = por %p145, %p146
      %s149 = sadd.s32 %s148, 1
      %p152 = scmp.eq.s32.totalorder %s30, 11
      %p153 = scmp.ne.s32.totalorder %s148, %s150
      %p154 = scmp.eq.s32.totalorder %s30, 0
      %p155 = por %p153, %p154
      %p156 = scmp.ne.s32.totalorder %s148, %s150
      %p157 = scmp.eq.s32.totalorder %s35, 11
      %p158 = por %p156, %p157
      %p159 = scmp.ne.s32.totalorder %s150, %s151
      %p160 = scmp.eq.s32.totalorder %s35, 0
      %p161 = por %p159, %p160
      %p162 = scmp.ne.s32.totalorder %s150, %s151
      %p163 = scmp.eq.s32.totalorder %s36, 11
      %p164 = por %p162, %p163
      %p166 = scmp.ne.s32.totalorder %s151, %s165
      %p167 = scmp.eq.s32.totalorder %s36, 0
      %p168 = por %p166, %p167
      %s170 = sadd.s32 %s169, 1
      %p173 = scmp.eq.s32.totalorder %s30, 11
      %p174 = scmp.ne.s32.totalorder %s169, %s171
      %p175 = scmp.eq.s32.totalorder %s30, 0
      %p176 = por %p174, %p175
      %p177 = scmp.ne.s32.totalorder %s169, %s171
      %p178 = scmp.eq.s32.totalorder %s35, 11
      %p179 = por %p177, %p178
      %p180 = scmp.ne.s32.totalorder %s171, %s172
      %p181 = scmp.eq.s32.totalorder %s35, 0
      %p182 = por %p180, %p181
      %p183 = scmp.ne.s32.totalorder %s171, %s172
      %p184 = scmp.eq.s32.totalorder %s36, 11
      %p185 = por %p183, %p184
      %p187 = scmp.ne.s32.totalorder %s172, %s186
      %p188 = scmp.eq.s32.totalorder %s36, 0
      %p189 = por %p187, %p188
      %s191 = sadd.s32 %s190, 1
      %p194 = scmp.eq.s32.totalorder %s30, 11
      %p195 = scmp.ne.s32.totalorder %s190, %s192
      %p196 = scmp.eq.s32.totalorder %s30, 0
      %p197 = por %p195, %p196
      %p198 = scmp.ne.s32.totalorder %s190, %s192
      %p199 = scmp.eq.s32.totalorder %s35, 11
      %p200 = por %p198, %p199
      %p201 = scmp.ne.s32.totalorder %s192, %s193
      %p202 = scmp.eq.s32.totalorder %s35, 0
      %p203 = por %p201, %p202
      %p204 = scmp.ne.s32.totalorder %s192, %s193
      %p205 = scmp.eq.s32.totalorder %s36, 11
      %p206 = por %p204, %p205
      %p208 = scmp.ne.s32.totalorder %s193, %s207
      %p209 = scmp.eq.s32.totalorder %s36, 0
      %p210 = por %p208, %p209
      %s212 = sadd.s32 %s211, 1
      %p215 = scmp.eq.s32.totalorder %s30, 11
      %p216 = scmp.ne.s32.totalorder %s211, %s213
      %p217 = scmp.eq.s32.totalorder %s30, 0
      %p218 = por %p216, %p217
      %p219 = scmp.ne.s32.totalorder %s211, %s213
      %p220 = scmp.eq.s32.totalorder %s35, 11
      %p221 = por %p219, %p220
      %p222 = scmp.ne.s32.totalorder %s213, %s214
      %p223 = scmp.eq.s32.totalorder %s35, 0
      %p224 = por %p222, %p223
      %p225 = scmp.ne.s32.totalorder %s213, %s214
      %p226 = scmp.eq.s32.totalorder %s36, 11
      %p227 = por %p225, %p226
      %p229 = scmp.ne.s32.totalorder %s214, %s228
      %p230 = scmp.eq.s32.totalorder %s36, 0
      %p231 = por %p229, %p230
      %s233 = sadd.s32 %s232, 1
      %p236 = scmp.eq.s32.totalorder %s30, 11
      %p237 = scmp.ne.s32.totalorder %s232, %s234
      %p238 = scmp.eq.s32.totalorder %s30, 0
      %p239 = por %p237, %p238
      %p240 = scmp.ne.s32.totalorder %s232, %s234
      %p241 = scmp.eq.s32.totalorder %s35, 11
      %p242 = por %p240, %p241
      %p243 = scmp.ne.s32.totalorder %s234, %s235
      %p244 = scmp.eq.s32.totalorder %s35, 0
      %p245 = por %p243, %p244
      %p246 = scmp.ne.s32.totalorder %s234, %s235
      %p247 = scmp.eq.s32.totalorder %s36, 11
      %p248 = por %p246, %p247
      %p250 = scmp.ne.s32.totalorder %s235, %s249
      %p251 = scmp.eq.s32.totalorder %s36, 0
      %p252 = por %p250, %p251
      %s254 = sadd.s32 %s253, 1
      %p257 = scmp.eq.s32.totalorder %s30, 11
      %p258 = scmp.ne.s32.totalorder %s253, %s255
      %p259 = scmp.eq.s32.totalorder %s30, 0
      %p260 = por %p258, %p259
      %p261 = scmp.ne.s32.totalorder %s253, %s255
      %p262 = scmp.eq.s32.totalorder %s35, 11
      %p263 = por %p261, %p262
      %p264 = scmp.ne.s32.totalorder %s255, %s256
      %p265 = scmp.eq.s32.totalorder %s35, 0
      %p266 = por %p264, %p265
      %p267 = scmp.ne.s32.totalorder %s255, %s256
      %p268 = scmp.eq.s32.totalorder %s36, 11
      %p269 = por %p267, %p268
      %p271 = scmp.ne.s32.totalorder %s256, %s270
      %p272 = scmp.eq.s32.totalorder %s36, 0
      %p273 = por %p271, %p272
      %s275 = sadd.s32 %s274, 1
      %p278 = scmp.eq.s32.totalorder %s30, 11
      %p279 = scmp.ne.s32.totalorder %s274, %s276
      %p280 = scmp.eq.s32.totalorder %s30, 0
      %p281 = por %p279, %p280
      %p282 = scmp.ne.s32.totalorder %s274, %s276
      %p283 = scmp.eq.s32.totalorder %s35, 11
      %p284 = por %p282, %p283
      %p285 = scmp.ne.s32.totalorder %s276, %s277
      %p286 = scmp.eq.s32.totalorder %s35, 0
      %p287 = por %p285, %p286
      %p288 = scmp.ne.s32.totalorder %s276, %s277
      %p289 = scmp.eq.s32.totalorder %s36, 11
      %p290 = por %p288, %p289
      %p292 = scmp.ne.s32.totalorder %s277, %s291
      %p293 = scmp.eq.s32.totalorder %s36, 0
      %p294 = por %p292, %p293
      %s296 = sadd.s32 %s295, 1
      %p299 = scmp.eq.s32.totalorder %s30, 11
      %p300 = scmp.ne.s32.totalorder %s295, %s297
      %p301 = scmp.eq.s32.totalorder %s30, 0
      %p302 = por %p300, %p301
      %p303 = scmp.ne.s32.totalorder %s295, %s297
      %p304 = scmp.eq.s32.totalorder %s35, 11
      %p305 = por %p303, %p304
      %p306 = scmp.ne.s32.totalorder %s297, %s298
      %p307 = scmp.eq.s32.totalorder %s35, 0
      %p308 = por %p306, %p307
      %p309 = scmp.ne.s32.totalorder %s297, %s298
      %p310 = scmp.eq.s32.totalorder %s36, 11
      %p311 = por %p309, %p310
      %p313 = scmp.ne.s32.totalorder %s298, %s312
      %p314 = scmp.eq.s32.totalorder %s36, 0
      %p315 = por %p313, %p314
      %s317 = sadd.s32 %s316, 1
      %p320 = scmp.eq.s32.totalorder %s30, 11
      %p321 = scmp.ne.s32.totalorder %s316, %s318
      %p322 = scmp.eq.s32.totalorder %s30, 0
      %p323 = por %p321, %p322
      %p324 = scmp.ne.s32.totalorder %s316, %s318
      %p325 = scmp.eq.s32.totalorder %s35, 11
      %p326 = por %p324, %p325
      %p327 = scmp.ne.s32.totalorder %s318, %s319
      %p328 = scmp.eq.s32.totalorder %s35, 0
      %p329 = por %p327, %p328
      %p330 = scmp.ne.s32.totalorder %s318, %s319
      %p331 = scmp.eq.s32.totalorder %s36, 11
      %p332 = por %p330, %p331
      %p334 = scmp.ne.s32.totalorder %s319, %s333
      %p335 = scmp.eq.s32.totalorder %s36, 0
      %p336 = por %p334, %p335
      %s338 = sadd.s32 %s337, 1
      %p341 = scmp.eq.s32.totalorder %s30, 11
      %p342 = scmp.ne.s32.totalorder %s337, %s339
      %p343 = scmp.eq.s32.totalorder %s30, 0
      %p344 = por %p342, %p343
      %p345 = scmp.ne.s32.totalorder %s337, %s339
      %p346 = scmp.eq.s32.totalorder %s35, 11
      %p347 = por %p345, %p346
      %p348 = scmp.ne.s32.totalorder %s339, %s340
      %p349 = scmp.eq.s32.totalorder %s35, 0
      %p350 = por %p348, %p349
      %p351 = scmp.ne.s32.totalorder %s339, %s340
      %p352 = scmp.eq.s32.totalorder %s36, 11
      %p353 = por %p351, %p352
      %p355 = scmp.ne.s32.totalorder %s340, %s354
      %p356 = scmp.eq.s32.totalorder %s36, 0
      %p357 = por %p355, %p356
      %s359 = sadd.s32 %s358, 1
      %p362 = scmp.eq.s32.totalorder %s30, 11
      %p363 = scmp.ne.s32.totalorder %s358, %s360
      %p364 = scmp.eq.s32.totalorder %s30, 0
      %p365 = por %p363, %p364
      %p366 = scmp.ne.s32.totalorder %s358, %s360
      %p367 = scmp.eq.s32.totalorder %s35, 11
      %p368 = por %p366, %p367
      %p369 = scmp.ne.s32.totalorder %s360, %s361
      %p370 = scmp.eq.s32.totalorder %s35, 0
      %p371 = por %p369, %p370
      %p372 = scmp.ne.s32.totalorder %s360, %s361
      %p373 = scmp.eq.s32.totalorder %s36, 11
      %p374 = por %p372, %p373
      %p376 = scmp.ne.s32.totalorder %s361, %s375
      %p377 = scmp.eq.s32.totalorder %s36, 0
      %p378 = por %p376, %p377
      %s379 = ssub.s32 %s37, %s56
      %p380 = scmp.eq.s32.totalorder %s379, 0
      %s382 = sadd.s32 %s381, 1
      %s383 = scalar_select %p380, %s381, %s382
      %p386 = pneg %p380
      %p387 = scmp.eq.s32.totalorder %s30, 11
      %p388 = por %p386, %p387
      %p389 = scmp.ne.s32.totalorder %s381, %s384
      %p390 = scmp.eq.s32.totalorder %s30, 0
      %p391 = por %p389, %p390
      %p392 = scmp.ne.s32.totalorder %s381, %s384
      %p393 = scmp.eq.s32.totalorder %s35, 11
      %p394 = por %p392, %p393
      %p395 = scmp.ne.s32.totalorder %s384, %s385
      %p396 = scmp.eq.s32.totalorder %s35, 0
      %p397 = por %p395, %p396
      %p398 = scmp.ne.s32.totalorder %s384, %s385
      %p399 = scmp.eq.s32.totalorder %s36, 11
      %p400 = por %p398, %p399
      %p402 = scmp.ne.s32.totalorder %s385, %s401
      %p403 = scmp.eq.s32.totalorder %s36, 0
      %p404 = por %p402, %p403
      %p405 = scmp.le.s32.totalorder 1, %s30
      %p406 = scmp.lt.s32.totalorder %s30, 13
      %p407 = pnand %p405, %p406
      %p408 = pneg %p407
      // Predicated region
      $region9: #{tpu_custom_call.1} parent=5 // pred_check
        _
      $region10: #{tpu_custom_call.1} parent=5 // pred_check_branch
        %410 = sbr.rel (%p407) target = $region12
      $region11: #{tpu_custom_call.1} parent=5 // pred_region
        %s411 = ssub.s32 %s30, 1
        // Predicated region
        $region13: #{tpu_custom_call.1} parent=11 // pred_check
          %p412 = pneg %p98
        $region14: #{tpu_custom_call.1} parent=11 // pred_check_branch
          %414 = sbr.rel (%p412) target = $region16
        $region15: #{tpu_custom_call.1} parent=11 // pred_region
          _
        $region16: #{tpu_custom_call.1} parent=11 // pred_fallthru
          _
        // Predicated region
        $region17: #{tpu_custom_call.1} parent=11 // pred_check
          %p415 = pneg %p119
        $region18: #{tpu_custom_call.1} parent=11 // pred_check_branch
          %417 = sbr.rel (%p415) target = $region20
        $region19: #{tpu_custom_call.1} parent=11 // pred_region
          %s419 = ssub.s32 16, 16
          %420 = vsyncadd [#allocation12], %s419
          %s422 = sshll.u32 [#allocation11], 4
          %s423 = int_to_ptr.vmem [resolvable:$true] %s422
          %425 = dma.hbm_to_vmem [thread:$0]  %s2, 16, %s423, [#allocation12]
        $region20: #{tpu_custom_call.1} parent=11 // pred_fallthru
          _
        // Predicated region
        $region21: #{tpu_custom_call.1} parent=11 // pred_check
          %p426 = pneg %p140
        $region22: #{tpu_custom_call.1} parent=11 // pred_check_branch
          %428 = sbr.rel (%p426) target = $region24
        $region23: #{tpu_custom_call.1} parent=11 // pred_region
          %s430 = ssub.s32 1024, 1024
          %431 = vsyncadd [#allocation12], %s430
          %s432 = sshll.u32 [#allocation13], 4
          %s433 = int_to_ptr.vmem [resolvable:$true] %s432
          %438 = dma.hbm_to_vmem [thread:$0]  %s3, 1024, %s433, [#allocation12], 64, 64, 4
        $region24: #{tpu_custom_call.1} parent=11 // pred_fallthru
          _
        // Predicated region
        $region25: #{tpu_custom_call.1} parent=11 // pred_check
          %p439 = pneg %p161
        $region26: #{tpu_custom_call.1} parent=11 // pred_check_branch
          %441 = sbr.rel (%p439) target = $region28
        $region27: #{tpu_custom_call.1} parent=11 // pred_region
          %s443 = ssub.s32 1024, 1024
          %444 = vsyncadd [#allocation15], %s443
          %s445 = sshll.u32 [#allocation14], 4
          %s446 = int_to_ptr.vmem [resolvable:$true] %s445
          %451 = dma.hbm_to_vmem [thread:$0]  %s4, 1024, %s446, [#allocation15], 64, 64, 4
        $region28: #{tpu_custom_call.1} parent=11 // pred_fallthru
          _
        // Predicated region
        $region29: #{tpu_custom_call.1} parent=11 // pred_check
          %p452 = pneg %p182
        $region30: #{tpu_custom_call.1} parent=11 // pred_check_branch
          %454 = sbr.rel (%p452) target = $region32
        $region31: #{tpu_custom_call.1} parent=11 // pred_region
          %s456 = ssub.s32 1024, 1024
          %457 = vsyncadd [#allocation15], %s456
          %s458 = sshll.u32 [#allocation16], 4
          %s459 = int_to_ptr.vmem [resolvable:$true] %s458
          %464 = dma.hbm_to_vmem [thread:$0]  %s5, 1024, %s459, [#allocation15], 64, 64, 4
        $region32: #{tpu_custom_call.1} parent=11 // pred_fallthru
          _
        // Predicated region
        $region33: #{tpu_custom_call.1} parent=11 // pred_check
          %p465 = pneg %p203
        $region34: #{tpu_custom_call.1} parent=11 // pred_check_branch
          %467 = sbr.rel (%p465) target = $region36
        $region35: #{tpu_custom_call.1} parent=11 // pred_region
          _
        $region36: #{tpu_custom_call.1} parent=11 // pred_fallthru
          _
        // Predicated region
        $region37: #{tpu_custom_call.1} parent=11 // pred_check
          %p468 = pneg %p224
        $region38: #{tpu_custom_call.1} parent=11 // pred_check_branch
          %470 = sbr.rel (%p468) target = $region40
        $region39: #{tpu_custom_call.1} parent=11 // pred_region
          _
        $region40: #{tpu_custom_call.1} parent=11 // pred_fallthru
          _
        // Predicated region
        $region41: #{tpu_custom_call.1} parent=11 // pred_check
          %p471 = pneg %p245
        $region42: #{tpu_custom_call.1} parent=11 // pred_check_branch
          %473 = sbr.rel (%p471) target = $region44
        $region43: #{tpu_custom_call.1} parent=11 // pred_region
          _
        $region44: #{tpu_custom_call.1} parent=11 // pred_fallthru
          _
        // Predicated region
        $region45: #{tpu_custom_call.1} parent=11 // pred_check
          %p474 = pneg %p266
        $region46: #{tpu_custom_call.1} parent=11 // pred_check_branch
          %476 = sbr.rel (%p474) target = $region48
        $region47: #{tpu_custom_call.1} parent=11 // pred_region
          %s478 = ssub.s32 1024, 1024
          %479 = vsyncadd [#allocation18], %s478
          %s480 = sshll.u32 [#allocation17], 4
          %s481 = int_to_ptr.vmem [resolvable:$true] %s480
          %486 = dma.hbm_to_vmem [thread:$0]  %s9, 1024, %s481, [#allocation18], 64, 64, 4
        $region48: #{tpu_custom_call.1} parent=11 // pred_fallthru
          _
        // Predicated region
        $region49: #{tpu_custom_call.1} parent=11 // pred_check
          %p487 = pneg %p287
        $region50: #{tpu_custom_call.1} parent=11 // pred_check_branch
          %489 = sbr.rel (%p487) target = $region52
        $region51: #{tpu_custom_call.1} parent=11 // pred_region
          _
        $region52: #{tpu_custom_call.1} parent=11 // pred_fallthru
          _
        // Predicated region
        $region53: #{tpu_custom_call.1} parent=11 // pred_check
          %p490 = pneg %p308
        $region54: #{tpu_custom_call.1} parent=11 // pred_check_branch
          %492 = sbr.rel (%p490) target = $region56
        $region55: #{tpu_custom_call.1} parent=11 // pred_region
          _
        $region56: #{tpu_custom_call.1} parent=11 // pred_fallthru
          _
        // Predicated region
        $region57: #{tpu_custom_call.1} parent=11 // pred_check
          %p493 = pneg %p329
        $region58: #{tpu_custom_call.1} parent=11 // pred_check_branch
          %495 = sbr.rel (%p493) target = $region60
        $region59: #{tpu_custom_call.1} parent=11 // pred_region
          _
        $region60: #{tpu_custom_call.1} parent=11 // pred_fallthru
          _
        // Predicated region
        $region61: #{tpu_custom_call.1} parent=11 // pred_check
          %p496 = pneg %p350
        $region62: #{tpu_custom_call.1} parent=11 // pred_check_branch
          %498 = sbr.rel (%p496) target = $region64
        $region63: #{tpu_custom_call.1} parent=11 // pred_region
          %s500 = ssub.s32 4096, 4096
          %501 = vsyncadd [#allocation18], %s500
          %s502 = sshll.u32 [#allocation19], 4
          %s503 = int_to_ptr.vmem [resolvable:$true] %s502
          %508 = dma.hbm_to_vmem [thread:$0]  %s13, 4096, %s503, [#allocation18], 128, 128, 8
        $region64: #{tpu_custom_call.1} parent=11 // pred_fallthru
          _
        // Predicated region
        $region65: #{tpu_custom_call.1} parent=11 // pred_check
          %p509 = pneg %p371
        $region66: #{tpu_custom_call.1} parent=11 // pred_check_branch
          %511 = sbr.rel (%p509) target = $region68
        $region67: #{tpu_custom_call.1} parent=11 // pred_region
          _
        $region68: #{tpu_custom_call.1} parent=11 // pred_fallthru
          _
      $region12: #{tpu_custom_call.1} parent=5 // pred_fallthru
        _
      %p512 = scmp.lt.s32.totalorder %s30, 12
      // Predicated region
      $region69: #{tpu_custom_call.1} parent=5 // pred_check
        %p513 = pneg %p512
      $region70: #{tpu_custom_call.1} parent=5 // pred_check_branch
        %515 = sbr.rel (%p513) target = $region72
      $region71: #{tpu_custom_call.1} parent=5 // pred_region
        // Predicated region
        $region73: #{tpu_custom_call.1} parent=71 // pred_check
          %p516 = pneg %p71
        $region74: #{tpu_custom_call.1} parent=71 // pred_check_branch
          %518 = sbr.rel (%p516) target = $region76
        $region75: #{tpu_custom_call.1} parent=71 // pred_region
          %s519 = sand.u32 %s61, 1
          %s520 = scalar_lea.sflag [#allocation9], %s519
          %s521 = sand.u32 %s61, 1
          %s522 = smul.addr %s521, 4
          %s523 = scalar_lea.vmem [#allocation8], %s522
          %s525 = ssub.s32 64, 64
          %526 = vsyncadd %s520, %s525
          %s527 = smul.addr %s37, 3
          %s528 = sadd.s32 %s39, %s527
          %s529 = smul.addr %s528, 64
          %s530 = scalar_lea.hbm %s0, %s529
          %s532 = sshll.u32 %s523, 4
          %s533 = int_to_ptr.vmem [resolvable:$true] %s532
          %535 = dma.hbm_to_vmem [thread:$0]  %s530, 64, %s533, %s520
        $region76: #{tpu_custom_call.1} parent=71 // pred_fallthru
          _
      $region72: #{tpu_custom_call.1} parent=5 // pred_fallthru
        _
      %p536 = scmp.le.s32.totalorder 1, %s30
      %p537 = scmp.lt.s32.totalorder %s30, 13
      %p538 = pnand %p536, %p537
      %p539 = pneg %p538
      // Predicated region
      $region77: #{tpu_custom_call.1} parent=5 // pred_check
        _
      $region78: #{tpu_custom_call.1} parent=5 // pred_check_branch
        %541 = sbr.rel (%p538) target = $region80
      $region79: #{tpu_custom_call.1} parent=5 // pred_region
        %s542 = ssub.s32 %s30, 1
        %s543 = sand.u32 %s64, 1
        %s544 = scalar_lea.sflag [#allocation9], %s543
        %s545 = sand.u32 %s64, 1
        %s546 = smul.addr %s545, 4
        %s547 = scalar_lea.vmem [#allocation8], %s546
        // Predicated region
        $region81: #{tpu_custom_call.1} parent=79 // pred_check
          %p548 = pneg %p77
        $region82: #{tpu_custom_call.1} parent=79 // pred_check_branch
          %550 = sbr.rel (%p548) target = $region84
        $region83: #{tpu_custom_call.1} parent=79 // pred_region
          %551 = dma.done %s544, 64
        $region84: #{tpu_custom_call.1} parent=79 // pred_fallthru
          _
        // Predicated region
        $region85: #{tpu_custom_call.1} parent=79 // pred_check
          %p552 = pneg %p119
        $region86: #{tpu_custom_call.1} parent=79 // pred_check_branch
          %554 = sbr.rel (%p552) target = $region88
        $region87: #{tpu_custom_call.1} parent=79 // pred_region
          %555 = dma.done [#allocation12], 16
        $region88: #{tpu_custom_call.1} parent=79 // pred_fallthru
          _
        // Predicated region
        $region89: #{tpu_custom_call.1} parent=79 // pred_check
          %p556 = pneg %p140
        $region90: #{tpu_custom_call.1} parent=79 // pred_check_branch
          %558 = sbr.rel (%p556) target = $region92
        $region91: #{tpu_custom_call.1} parent=79 // pred_region
          %559 = dma.done [#allocation12], 1024
        $region92: #{tpu_custom_call.1} parent=79 // pred_fallthru
          _
        // Predicated region
        $region93: #{tpu_custom_call.1} parent=79 // pred_check
          %p560 = pneg %p161
        $region94: #{tpu_custom_call.1} parent=79 // pred_check_branch
          %562 = sbr.rel (%p560) target = $region96
        $region95: #{tpu_custom_call.1} parent=79 // pred_region
          %563 = dma.done [#allocation15], 1024
        $region96: #{tpu_custom_call.1} parent=79 // pred_fallthru
          _
        // Predicated region
        $region97: #{tpu_custom_call.1} parent=79 // pred_check
          %p564 = pneg %p182
        $region98: #{tpu_custom_call.1} parent=79 // pred_check_branch
          %566 = sbr.rel (%p564) target = $region100
        $region99: #{tpu_custom_call.1} parent=79 // pred_region
          %567 = dma.done [#allocation15], 1024
        $region100: #{tpu_custom_call.1} parent=79 // pred_fallthru
          _
        // Predicated region
        $region101: #{tpu_custom_call.1} parent=79 // pred_check
          %p568 = pneg %p266
        $region102: #{tpu_custom_call.1} parent=79 // pred_check_branch
          %570 = sbr.rel (%p568) target = $region104
        $region103: #{tpu_custom_call.1} parent=79 // pred_region
          %571 = dma.done [#allocation18], 1024
        $region104: #{tpu_custom_call.1} parent=79 // pred_fallthru
          _
        // Predicated region
        $region105: #{tpu_custom_call.1} parent=79 // pred_check
          %p572 = pneg %p350
        $region106: #{tpu_custom_call.1} parent=79 // pred_check_branch
          %574 = sbr.rel (%p572) target = $region108
        $region107: #{tpu_custom_call.1} parent=79 // pred_region
          %575 = dma.done [#allocation18], 4096
        $region108: #{tpu_custom_call.1} parent=79 // pred_fallthru
          _
        %s576 = sand.u32 %s64, 1
        %s577 = scalar_lea.sflag [#allocation9], %s576
        %s578 = sand.u32 %s64, 1
        %s579 = smul.addr %s578, 4
        %s580 = scalar_lea.vmem [#allocation8], %s579
        %p581 = pneg %p77
        %p582 = pneg %p74
        %p583 = pneg %p98
        %p584 = pneg %p95
        %p585 = pneg %p119
        %p586 = pneg %p116
        %p587 = pneg %p140
        %p588 = pneg %p137
        %p589 = pneg %p161
        %p590 = pneg %p158
        %p591 = pneg %p182
        %p592 = pneg %p179
        %p593 = pneg %p203
        %p594 = pneg %p200
        %p595 = pneg %p224
        %p596 = pneg %p221
        %p597 = pneg %p245
        %p598 = pneg %p242
        %p599 = pneg %p266
        %p600 = pneg %p263
        %p601 = pneg %p287
        %p602 = pneg %p284
        %p603 = pneg %p308
        %p604 = pneg %p305
        %p605 = pneg %p329
        %p606 = pneg %p326
        %p607 = pneg %p350
        %p608 = pneg %p347
        %p609 = pneg %p371
        %p610 = pneg %p368
        %p611 = pneg %p397
        %p612 = pneg %p394
        %s613 = sand.u32 %s384, 1
        %s614 = scalar_lea.sflag [#allocation10], %s613
        %s615 = sand.u32 %s384, 1
        %s616 = scalar_lea.vmem [#allocation20], %s615
        %p618 = scmp.eq.s32.totalorder %s41, 0
        %p619 = scmp.eq.s32.totalorder %s42, 0
        %p620 = pnand %p618, %p619
        %p621 = pneg %p620
        // Predicated region
        $region109: #{tpu_custom_call.1} parent=79 // pred_check
          _
        $region110: #{tpu_custom_call.1} parent=79 // pred_check_branch
          %623 = sbr.rel (%p620) target = $region112
        $region111: #{tpu_custom_call.1} parent=79 // pred_region
          %624 = vst [vmem:[#allocation2] sm:$0x1] 0.0
          %625 = vst [vmem:[#allocation3] sm:$0x1] 0.0
        $region112: #{tpu_custom_call.1} parent=79 // pred_fallthru
          _
        %p626 = scmp.eq.s32.totalorder %s41, 1
        %p627 = pnand %p626, %p619
        %p628 = pneg %p627
        // Predicated region
        $region113: #{tpu_custom_call.1} parent=79 // pred_check
          _
        $region114: #{tpu_custom_call.1} parent=79 // pred_check_branch
          %630 = sbr.rel (%p627) target = $region116
        $region115: #{tpu_custom_call.1} parent=79 // pred_region
          %631 = vst [vmem:[#allocation4] sm:$0x1] -1e+30
          %632 = vst [vmem:[#allocation5] sm:$0x1] 0.0
          %633 = vst [vmem:[#allocation6] sm:$0x1] 0.0
          %634 = vst [vmem:[#allocation7] sm:$0x1] 0.0
        $region116: #{tpu_custom_call.1} parent=79 // pred_fallthru
          _
        %v635 = vld [vmem:[%s547] sm:$0xf]
        %v636 = vunpack.c.l.bf16 %v635
        %v637 = vld [vmem:[%s1] sm:$0x1]
        %v638 = vld [vmem:[#allocation11] sm:$0x1]
        %639 = vadd.xlane.f32.xlu0 %v636
        %v640 = vpop.xlane.xlu0 %639
        %v641 = vrcp.pop 128.0
        %v642 = vmul.f32 %v640, %v641
        %v643 = vsub.f32 %v636, %v642
        %v644 = vmul.f32 %v643, %v643
        %645 = vadd.xlane.f32.xlu0 %v644
        %v646 = vpop.xlane.xlu0 %645
        %v647 = vmul.f32 %v646, %v641
        %v648 = vadd.f32 %v647, 1e-05
        %v649 = vrsqrt.pop %v648
        %v650 = vmul.f32 %v643, %v649
        %v652 = vlaneseq
        %v653 = vshrl.u32 %v652, 7
        %v654 = vsub.s32 0, %v653
        %v655 = vrot.slane %v637, %v654
        %v657 = vmul.f32 %v650, %v655
        %v659 = vlaneseq
        %v660 = vshrl.u32 %v659, 7
        %v661 = vsub.s32 0, %v660
        %v662 = vrot.slane %v638, %v661
        %v664 = vadd.f32 %v657, %v662
        %s665 = smul.u32 %s42, 8
        %v666 = vlaneseq
        %v667 = vshrl.u32 %v666, 7
        %v668 = vstv %s665
        %v669 = vadd.s32 %v668, %v667
        %vm670 = vcmp.lt.s32.totalorder %v669, 20
        // Predicated region
        $region117: #{tpu_custom_call.1} parent=79 // pred_check
          %p671 = pneg %p618
        $region118: #{tpu_custom_call.1} parent=79 // pred_check_branch
          %673 = sbr.rel (%p671) target = $region120
        $region119: #{tpu_custom_call.1} parent=79 // pred_region
          %v674 = vsel %vm670, 1, 0
          %vm675 = vcmp.eq.s32.totalorder %v674, 1
          %v676 = vsel %vm675, %v664, 0.0
          %v677 = vld [vmem:[#allocation2] sm:$0x1]
          %v678 = vrot.slane %v676, 4
          %v679 = vadd.f32 %v676, %v678
          %v680 = vrot.slane %v679, 2
          %v681 = vadd.f32 %v679, %v680
          %v682 = vrot.slane %v681, 1
          %v683 = vadd.f32 %v681, %v682
          %v684 = vadd.f32 %v677, %v683
          %685 = vst [vmem:[#allocation2] sm:$0x1] %v684
          %v686 = vld [vmem:[#allocation3] sm:$0x1]
          %v687 = vmul.f32 %v676, %v676
          %v688 = vrot.slane %v687, 4
          %v689 = vadd.f32 %v687, %v688
          %v690 = vrot.slane %v689, 2
          %v691 = vadd.f32 %v689, %v690
          %v692 = vrot.slane %v691, 1
          %v693 = vadd.f32 %v691, %v692
          %v694 = vadd.f32 %v686, %v693
          %695 = vst [vmem:[#allocation3] sm:$0x1] %v694
        $region120: #{tpu_custom_call.1} parent=79 // pred_fallthru
          _
        // Predicated region
        $region121: #{tpu_custom_call.1} parent=79 // pred_check
          %p696 = pneg %p626
        $region122: #{tpu_custom_call.1} parent=79 // pred_check_branch
          %698 = sbr.rel (%p696) target = $region124
        $region123: #{tpu_custom_call.1} parent=79 // pred_region
          %v699 = vld [vmem:[#allocation2] sm:$0x1]
          %v700 = vmul.f32 %v699, 0.05
          %v701 = vld [vmem:[#allocation3] sm:$0x1]
          %v702 = vmul.f32 %v701, 0.05
          %v703 = vmul.f32 %v700, %v700
          %v704 = vsub.f32 %v702, %v703
          %v705 = vmax.f32 %v704, 1e-12
          %v706 = vrsqrt.pop %v705
          %v707 = vmul.f32 %v705, %v706
          %vm708 = vcmp.eq.f32.partialorder %v705, inf
          %v709 = vsel %vm708, %v705, %v707
          %vm710 = vcmp.eq.f32.partialorder %v705, 0.0
          %v711 = vand.u32 %v705, 2147483648
          %v712 = vsel %vm710, %v711, %v709
          %v713 = vpack.c.bf16 %v664, %v664
          %v714 = vld [vmem:[#allocation13] sm:$0xf]
          %v715 = vld [vmem:[#allocation13 + $0x4] sm:$0xf]
          %v716 = vld [vmem:[#allocation13 + $0x8] sm:$0xf]
          %v717 = vld [vmem:[#allocation13 + $0xc] sm:$0xf]
          %v718 = vld [vmem:[#allocation13 + $0x10] sm:$0xf]
          %v719 = vld [vmem:[#allocation13 + $0x14] sm:$0xf]
          %v720 = vld [vmem:[#allocation13 + $0x18] sm:$0xf]
          %v721 = vld [vmem:[#allocation13 + $0x1c] sm:$0xf]
          %v722 = vld [vmem:[#allocation13 + $0x20] sm:$0xf]
          %v723 = vld [vmem:[#allocation13 + $0x24] sm:$0xf]
          %v724 = vld [vmem:[#allocation13 + $0x28] sm:$0xf]
          %v725 = vld [vmem:[#allocation13 + $0x2c] sm:$0xf]
          %v726 = vld [vmem:[#allocation13 + $0x30] sm:$0xf]
          %v727 = vld [vmem:[#allocation13 + $0x34] sm:$0xf]
          %v728 = vld [vmem:[#allocation13 + $0x38] sm:$0xf]
          %v729 = vld [vmem:[#allocation13 + $0x3c] sm:$0xf]
          %v730 = vpack.c.bf16 %v700, %v700
          %v731 = vld [vmem:[#allocation14] sm:$0xf]
          %v732 = vld [vmem:[#allocation14 + $0x4] sm:$0xf]
          %v733 = vld [vmem:[#allocation14 + $0x8] sm:$0xf]
          %v734 = vld [vmem:[#allocation14 + $0xc] sm:$0xf]
          %v735 = vld [vmem:[#allocation14 + $0x10] sm:$0xf]
          %v736 = vld [vmem:[#allocation14 + $0x14] sm:$0xf]
          %v737 = vld [vmem:[#allocation14 + $0x18] sm:$0xf]
          %v738 = vld [vmem:[#allocation14 + $0x1c] sm:$0xf]
          %v739 = vld [vmem:[#allocation14 + $0x20] sm:$0xf]
          %v740 = vld [vmem:[#allocation14 + $0x24] sm:$0xf]
          %v741 = vld [vmem:[#allocation14 + $0x28] sm:$0xf]
          %v742 = vld [vmem:[#allocation14 + $0x2c] sm:$0xf]
          %v743 = vld [vmem:[#allocation14 + $0x30] sm:$0xf]
          %v744 = vld [vmem:[#allocation14 + $0x34] sm:$0xf]
          %v745 = vld [vmem:[#allocation14 + $0x38] sm:$0xf]
          %v746 = vld [vmem:[#allocation14 + $0x3c] sm:$0xf]
          %v763 = vunpack.c.l.b16 %v731
          %v764 = vunpack.c.l.b16 %v732
          %v765 = vunpack.c.l.b16 %v733
          %v766 = vunpack.c.l.b16 %v734
          %v767 = vunpack.c.l.b16 %v735
          %v768 = vunpack.c.l.b16 %v736
          %v769 = vunpack.c.l.b16 %v737
          %v770 = vunpack.c.l.b16 %v738
          %v771 = vunpack.c.l.b16 %v739
          %v772 = vunpack.c.l.b16 %v740
          %v773 = vunpack.c.l.b16 %v741
          %v774 = vunpack.c.l.b16 %v742
          %v775 = vunpack.c.l.b16 %v743
          %v776 = vunpack.c.l.b16 %v744
          %v777 = vunpack.c.l.b16 %v745
          %v778 = vunpack.c.l.b16 %v746
          %v779 = vpack.c.b16 %v764, %v763
          %v780 = vpack.c.b16 %v766, %v765
          %v781 = vpack.c.b16 %v768, %v767
          %v782 = vpack.c.b16 %v770, %v769
          %v783 = vpack.c.b16 %v772, %v771
          %v784 = vpack.c.b16 %v774, %v773
          %v785 = vpack.c.b16 %v776, %v775
          %v786 = vpack.c.b16 %v778, %v777
          %795 = vmatprep.subr.bf16.mxu0 0
          %796 = vmatpush1.bf16.msra.mxu0 %v786
          %797 = vmatprep.subr.bf16.mxu0 0
          %798 = vmatpush1.bf16.msra.mxu0 %v785
          %799 = vmatprep.subr.bf16.mxu0 0
          %800 = vmatpush1.bf16.msra.mxu0 %v784
          %801 = vmatprep.subr.bf16.mxu0 0
          %802 = vmatpush1.bf16.msra.mxu0 %v783
          %803 = vmatprep.subr.bf16.mxu0 0
          %804 = vmatpush1.bf16.msra.mxu0 %v782
          %805 = vmatprep.subr.bf16.mxu0 0
          %806 = vmatpush1.bf16.msra.mxu0 %v781
          %807 = vmatprep.subr.bf16.mxu0 0
          %808 = vmatpush1.bf16.msra.mxu0 %v780
          %809 = vmatprep.subr.bf16.mxu0 0
          %810 = vmatpush1.bf16.msra.mxu0 %v779
          %811 = vmatprep.subr.bf16.mxu0 0
          %812 = vmatpush2.bf16.msra.mxu0 0
          %813 = vmatprep.subr.bf16.mxu0 0
          %814 = vmatpush2.bf16.msra.mxu0 0
          %815 = vmatprep.subr.bf16.mxu0 0
          %816 = vmatpush2.bf16.msra.mxu0 0
          %817 = vmatprep.subr.bf16.mxu0 0
          %818 = vmatpush2.bf16.msra.mxu0 0
          %819 = vmatprep.subr.bf16.mxu0 0
          %820 = vmatpush2.bf16.msra.mxu0 0
          %821 = vmatprep.subr.bf16.mxu0 0
          %822 = vmatpush2.bf16.msra.mxu0 0
          %823 = vmatprep.subr.bf16.mxu0 0
          %824 = vmatpush2.bf16.msra.mxu0 0
          %825 = vmatprep.subr.bf16.mxu0 0
          %826 = vmatpush2.bf16.msra.mxu0 0
          %827 = vmatprep.mubr.bf16.mxu0 0
          %828 = vmatmul.mubr.bf16.gmra.mxu0 %v730
          %v829 = vpop.f32.mrf.mxu0
          %v830 = vadd.f32 0.0, %v829
          %v831 = vpop.f32.mrf.mxu0
          %v832 = vpop.f32.mrf.mxu0
          %v833 = vpop.f32.mrf.mxu0
          %834 = vdwg.mxu0
          %v835 = vlaneseq
          %v836 = vshrl.u32 %v835, 7
          %v837 = vsub.s32 0, %v836
          %v838 = vrot.slane %v830, %v837
          %v855 = vunpack.c.l.b16 %v714
          %v856 = vunpack.c.l.b16 %v715
          %v857 = vunpack.c.l.b16 %v716
          %v858 = vunpack.c.l.b16 %v717
          %v859 = vunpack.c.l.b16 %v718
          %v860 = vunpack.c.l.b16 %v719
          %v861 = vunpack.c.l.b16 %v720
          %v862 = vunpack.c.l.b16 %v721
          %v863 = vunpack.c.l.b16 %v722
          %v864 = vunpack.c.l.b16 %v723
          %v865 = vunpack.c.l.b16 %v724
          %v866 = vunpack.c.l.b16 %v725
          %v867 = vunpack.c.l.b16 %v726
          %v868 = vunpack.c.l.b16 %v727
          %v869 = vunpack.c.l.b16 %v728
          %v870 = vunpack.c.l.b16 %v729
          %v871 = vpack.c.b16 %v856, %v855
          %v872 = vpack.c.b16 %v858, %v857
          %v873 = vpack.c.b16 %v860, %v859
          %v874 = vpack.c.b16 %v862, %v861
          %v875 = vpack.c.b16 %v864, %v863
          %v876 = vpack.c.b16 %v866, %v865
          %v877 = vpack.c.b16 %v868, %v867
          %v878 = vpack.c.b16 %v870, %v869
          %887 = vmatprep.subr.bf16.mxu0 0
          %888 = vmatpush1.bf16.msra.mxu0 %v878
          %889 = vmatprep.subr.bf16.mxu0 0
          %890 = vmatpush1.bf16.msra.mxu0 %v877
          %891 = vmatprep.subr.bf16.mxu0 0
          %892 = vmatpush1.bf16.msra.mxu0 %v876
          %893 = vmatprep.subr.bf16.mxu0 0
          %894 = vmatpush1.bf16.msra.mxu0 %v875
          %895 = vmatprep.subr.bf16.mxu0 0
          %896 = vmatpush1.bf16.msra.mxu0 %v874
          %897 = vmatprep.subr.bf16.mxu0 0
          %898 = vmatpush1.bf16.msra.mxu0 %v873
          %899 = vmatprep.subr.bf16.mxu0 0
          %900 = vmatpush1.bf16.msra.mxu0 %v872
          %901 = vmatprep.subr.bf16.mxu0 0
          %902 = vmatpush1.bf16.msra.mxu0 %v871
          %903 = vmatprep.subr.bf16.mxu0 0
          %904 = vmatpush2.bf16.msra.mxu0 0
          %905 = vmatprep.subr.bf16.mxu0 0
          %906 = vmatpush2.bf16.msra.mxu0 0
          %907 = vmatprep.subr.bf16.mxu0 0
          %908 = vmatpush2.bf16.msra.mxu0 0
          %909 = vmatprep.subr.bf16.mxu0 0
          %910 = vmatpush2.bf16.msra.mxu0 0
          %911 = vmatprep.subr.bf16.mxu0 0
          %912 = vmatpush2.bf16.msra.mxu0 0
          %913 = vmatprep.subr.bf16.mxu0 0
          %914 = vmatpush2.bf16.msra.mxu0 0
          %915 = vmatprep.subr.bf16.mxu0 0
          %916 = vmatpush2.bf16.msra.mxu0 0
          %917 = vmatprep.subr.bf16.mxu0 0
          %918 = vmatpush2.bf16.msra.mxu0 0
          %919 = vmatprep.mubr.bf16.mxu0 0
          %920 = vmatmul.mubr.bf16.gmra.mxu0 %v713
          %v921 = vpop.f32.mrf.mxu0
          %v922 = vadd.f32 %v838, %v921
          %v923 = vpop.f32.mrf.mxu0
          %v924 = vpop.f32.mrf.mxu0
          %v925 = vpop.f32.mrf.mxu0
          %926 = vdwg.mxu0
          %v927 = vpack.c.bf16 %v712, %v712
          %v928 = vld [vmem:[#allocation16] sm:$0xf]
          %v929 = vld [vmem:[#allocation16 + $0x4] sm:$0xf]
          %v930 = vld [vmem:[#allocation16 + $0x8] sm:$0xf]
          %v931 = vld [vmem:[#allocation16 + $0xc] sm:$0xf]
          %v932 = vld [vmem:[#allocation16 + $0x10] sm:$0xf]
          %v933 = vld [vmem:[#allocation16 + $0x14] sm:$0xf]
          %v934 = vld [vmem:[#allocation16 + $0x18] sm:$0xf]
          %v935 = vld [vmem:[#allocation16 + $0x1c] sm:$0xf]
          %v936 = vld [vmem:[#allocation16 + $0x20] sm:$0xf]
          %v937 = vld [vmem:[#allocation16 + $0x24] sm:$0xf]
          %v938 = vld [vmem:[#allocation16 + $0x28] sm:$0xf]
          %v939 = vld [vmem:[#allocation16 + $0x2c] sm:$0xf]
          %v940 = vld [vmem:[#allocation16 + $0x30] sm:$0xf]
          %v941 = vld [vmem:[#allocation16 + $0x34] sm:$0xf]
          %v942 = vld [vmem:[#allocation16 + $0x38] sm:$0xf]
          %v943 = vld [vmem:[#allocation16 + $0x3c] sm:$0xf]
          %v960 = vunpack.c.l.b16 %v928
          %v961 = vunpack.c.l.b16 %v929
          %v962 = vunpack.c.l.b16 %v930
          %v963 = vunpack.c.l.b16 %v931
          %v964 = vunpack.c.l.b16 %v932
          %v965 = vunpack.c.l.b16 %v933
          %v966 = vunpack.c.l.b16 %v934
          %v967 = vunpack.c.l.b16 %v935
          %v968 = vunpack.c.l.b16 %v936
          %v969 = vunpack.c.l.b16 %v937
          %v970 = vunpack.c.l.b16 %v938
          %v971 = vunpack.c.l.b16 %v939
          %v972 = vunpack.c.l.b16 %v940
          %v973 = vunpack.c.l.b16 %v941
          %v974 = vunpack.c.l.b16 %v942
          %v975 = vunpack.c.l.b16 %v943
          %v976 = vpack.c.b16 %v961, %v960
          %v977 = vpack.c.b16 %v963, %v962
          %v978 = vpack.c.b16 %v965, %v964
          %v979 = vpack.c.b16 %v967, %v966
          %v980 = vpack.c.b16 %v969, %v968
          %v981 = vpack.c.b16 %v971, %v970
          %v982 = vpack.c.b16 %v973, %v972
          %v983 = vpack.c.b16 %v975, %v974
          %992 = vmatprep.subr.bf16.mxu0 0
          %993 = vmatpush1.bf16.msra.mxu0 %v983
          %994 = vmatprep.subr.bf16.mxu0 0
          %995 = vmatpush1.bf16.msra.mxu0 %v982
          %996 = vmatprep.subr.bf16.mxu0 0
          %997 = vmatpush1.bf16.msra.mxu0 %v981
          %998 = vmatprep.subr.bf16.mxu0 0
          %999 = vmatpush1.bf16.msra.mxu0 %v980
          %1000 = vmatprep.subr.bf16.mxu0 0
          %1001 = vmatpush1.bf16.msra.mxu0 %v979
          %1002 = vmatprep.subr.bf16.mxu0 0
          %1003 = vmatpush1.bf16.msra.mxu0 %v978
          %1004 = vmatprep.subr.bf16.mxu0 0
          %1005 = vmatpush1.bf16.msra.mxu0 %v977
          %1006 = vmatprep.subr.bf16.mxu0 0
          %1007 = vmatpush1.bf16.msra.mxu0 %v976
          %1008 = vmatprep.subr.bf16.mxu0 0
          %1009 = vmatpush2.bf16.msra.mxu0 0
          %1010 = vmatprep.subr.bf16.mxu0 0
          %1011 = vmatpush2.bf16.msra.mxu0 0
          %1012 = vmatprep.subr.bf16.mxu0 0
          %1013 = vmatpush2.bf16.msra.mxu0 0
          %1014 = vmatprep.subr.bf16.mxu0 0
          %1015 = vmatpush2.bf16.msra.mxu0 0
          %1016 = vmatprep.subr.bf16.mxu0 0
          %1017 = vmatpush2.bf16.msra.mxu0 0
          %1018 = vmatprep.subr.bf16.mxu0 0
          %1019 = vmatpush2.bf16.msra.mxu0 0
          %1020 = vmatprep.subr.bf16.mxu0 0
          %1021 = vmatpush2.bf16.msra.mxu0 0
          %1022 = vmatprep.subr.bf16.mxu0 0
          %1023 = vmatpush2.bf16.msra.mxu0 0
          %1024 = vmatprep.mubr.bf16.mxu0 0
          %1025 = vmatmul.mubr.bf16.gmra.mxu0 %v927
          %v1026 = vpop.f32.mrf.mxu0
          %v1027 = vadd.f32 0.0, %v1026
          %v1028 = vpop.f32.mrf.mxu0
          %v1029 = vpop.f32.mrf.mxu0
          %v1030 = vpop.f32.mrf.mxu0
          %1031 = vdwg.mxu0
          %v1032 = vlaneseq
          %v1033 = vshrl.u32 %v1032, 7
          %v1034 = vsub.s32 0, %v1033
          %v1035 = vrot.slane %v1027, %v1034
          %v1036 = vadd.f32 %v922, %v1035
          %v1037 = vld [vmem:[%s6] sm:$0x1]
          %v1039 = vlaneseq
          %v1040 = vshrl.u32 %v1039, 7
          %v1041 = vsub.s32 0, %v1040
          %v1042 = vrot.slane %v1037, %v1041
          %v1044 = vadd.f32 %v1036, %v1042
          %v1045 = vmax.f32 %v1044, 0.0
          %v1046 = vld [vmem:[%s7] sm:$0x1]
          %v1048 = vlaneseq
          %v1049 = vshrl.u32 %v1048, 7
          %v1050 = vsub.s32 0, %v1049
          %v1051 = vrot.slane %v1046, %v1050
          %v1053 = vmul.f32 %v1045, %v1051
          %v1054 = vld [vmem:[%s8] sm:$0x1]
          %v1056 = vlaneseq
          %v1057 = vshrl.u32 %v1056, 7
          %v1058 = vsub.s32 0, %v1057
          %v1059 = vrot.slane %v1054, %v1058
          %v1061 = vadd.f32 %v1053, %v1059
          %v1062 = vtanh.pop %v1061
          %v1063 = vpack.c.bf16 %v1062, %v1062
          %v1064 = vld [vmem:[#allocation17] sm:$0xf]
          %v1065 = vld [vmem:[#allocation17 + $0x4] sm:$0xf]
          %v1066 = vld [vmem:[#allocation17 + $0x8] sm:$0xf]
          %v1067 = vld [vmem:[#allocation17 + $0xc] sm:$0xf]
          %v1068 = vld [vmem:[#allocation17 + $0x10] sm:$0xf]
          %v1069 = vld [vmem:[#allocation17 + $0x14] sm:$0xf]
          %v1070 = vld [vmem:[#allocation17 + $0x18] sm:$0xf]
          %v1071 = vld [vmem:[#allocation17 + $0x1c] sm:$0xf]
          %v1072 = vld [vmem:[#allocation17 + $0x20] sm:$0xf]
          %v1073 = vld [vmem:[#allocation17 + $0x24] sm:$0xf]
          %v1074 = vld [vmem:[#allocation17 + $0x28] sm:$0xf]
          %v1075 = vld [vmem:[#allocation17 + $0x2c] sm:$0xf]
          %v1076 = vld [vmem:[#allocation17 + $0x30] sm:$0xf]
          %v1077 = vld [vmem:[#allocation17 + $0x34] sm:$0xf]
          %v1078 = vld [vmem:[#allocation17 + $0x38] sm:$0xf]
          %v1079 = vld [vmem:[#allocation17 + $0x3c] sm:$0xf]
          %v1080 = vld [vmem:[%s10] sm:$0x1]
          %v1082 = vlaneseq
          %v1083 = vshrl.u32 %v1082, 7
          %v1084 = vsub.s32 0, %v1083
          %v1085 = vrot.slane %v1080, %v1084
          %v1103 = vunpack.c.l.b16 %v1064
          %v1104 = vunpack.c.l.b16 %v1065
          %v1105 = vunpack.c.l.b16 %v1066
          %v1106 = vunpack.c.l.b16 %v1067
          %v1107 = vunpack.c.l.b16 %v1068
          %v1108 = vunpack.c.l.b16 %v1069
          %v1109 = vunpack.c.l.b16 %v1070
          %v1110 = vunpack.c.l.b16 %v1071
          %v1111 = vunpack.c.l.b16 %v1072
          %v1112 = vunpack.c.l.b16 %v1073
          %v1113 = vunpack.c.l.b16 %v1074
          %v1114 = vunpack.c.l.b16 %v1075
          %v1115 = vunpack.c.l.b16 %v1076
          %v1116 = vunpack.c.l.b16 %v1077
          %v1117 = vunpack.c.l.b16 %v1078
          %v1118 = vunpack.c.l.b16 %v1079
          %v1119 = vpack.c.b16 %v1104, %v1103
          %v1120 = vpack.c.b16 %v1106, %v1105
          %v1121 = vpack.c.b16 %v1108, %v1107
          %v1122 = vpack.c.b16 %v1110, %v1109
          %v1123 = vpack.c.b16 %v1112, %v1111
          %v1124 = vpack.c.b16 %v1114, %v1113
          %v1125 = vpack.c.b16 %v1116, %v1115
          %v1126 = vpack.c.b16 %v1118, %v1117
          %1135 = vmatprep.subr.bf16.mxu0 0
          %1136 = vmatpush1.bf16.msra.mxu0 %v1126
          %1137 = vmatprep.subr.bf16.mxu0 0
          %1138 = vmatpush1.bf16.msra.mxu0 %v1125
          %1139 = vmatprep.subr.bf16.mxu0 0
          %1140 = vmatpush1.bf16.msra.mxu0 %v1124
          %1141 = vmatprep.subr.bf16.mxu0 0
          %1142 = vmatpush1.bf16.msra.mxu0 %v1123
          %1143 = vmatprep.subr.bf16.mxu0 0
          %1144 = vmatpush1.bf16.msra.mxu0 %v1122
          %1145 = vmatprep.subr.bf16.mxu0 0
          %1146 = vmatpush1.bf16.msra.mxu0 %v1121
          %1147 = vmatprep.subr.bf16.mxu0 0
          %1148 = vmatpush1.bf16.msra.mxu0 %v1120
          %1149 = vmatprep.subr.bf16.mxu0 0
          %1150 = vmatpush1.bf16.msra.mxu0 %v1119
          %1151 = vmatprep.subr.bf16.mxu0 0
          %1152 = vmatpush2.bf16.msra.mxu0 0
          %1153 = vmatprep.subr.bf16.mxu0 0
          %1154 = vmatpush2.bf16.msra.mxu0 0
          %1155 = vmatprep.subr.bf16.mxu0 0
          %1156 = vmatpush2.bf16.msra.mxu0 0
          %1157 = vmatprep.subr.bf16.mxu0 0
          %1158 = vmatpush2.bf16.msra.mxu0 0
          %1159 = vmatprep.subr.bf16.mxu0 0
          %1160 = vmatpush2.bf16.msra.mxu0 0
          %1161 = vmatprep.subr.bf16.mxu0 0
          %1162 = vmatpush2.bf16.msra.mxu0 0
          %1163 = vmatprep.subr.bf16.mxu0 0
          %1164 = vmatpush2.bf16.msra.mxu0 0
          %1165 = vmatprep.subr.bf16.mxu0 0
          %1166 = vmatpush2.bf16.msra.mxu0 0
          %1167 = vmatprep.mubr.bf16.mxu0 0
          %1168 = vmatmul.mubr.bf16.gmra.mxu0 %v1063
          %v1169 = vpop.f32.mrf.mxu0
          %v1170 = vadd.f32 %v1085, %v1169
          %v1171 = vpop.f32.mrf.mxu0
          %v1172 = vpop.f32.mrf.mxu0
          %v1173 = vpop.f32.mrf.mxu0
          %1174 = vdwg.mxu0
          %v1175 = vsel %vm670, 1, 0
          %vm1176 = vcmp.eq.s32.totalorder %v1175, 1
          %v1177 = vsel %vm1176, %v1170, -1e+30
          %v1178 = vrot.slane %v1177, 4
          %v1179 = vmax.f32 %v1177, %v1178
          %v1180 = vrot.slane %v1179, 2
          %v1181 = vmax.f32 %v1179, %v1180
          %v1182 = vrot.slane %v1181, 1
          %v1183 = vmax.f32 %v1181, %v1182
          %v1184 = vld [vmem:[#allocation4] sm:$0x1]
          %v1185 = vmax.f32 %v1184, %v1183
          %v1186 = vsub.f32 %v1184, %v1185
          %v1187 = vmul.f32 %v1186, 1.442695
          %v1188 = vpow.pop %v1187
          %v1190 = vlaneseq
          %v1191 = vshrl.u32 %v1190, 7
          %v1192 = vsub.s32 0, %v1191
          %v1193 = vrot.slane %v1185, %v1192
          %v1195 = vsub.f32 %v1170, %v1193
          %v1196 = vpack.c.bf16 %v1195, %v1195
          %v1198 = vmul.bf16 %v1196, 1069105081
          %v1199 = vpow.bf16.pop %v1198
          %v1200 = vunpack.c.l.bf16 %v1199
          %v1201 = vsel %vm1176, %v1200, 0.0
          %v1202 = vld [vmem:[#allocation5] sm:$0x1]
          %v1203 = vmul.f32 %v1188, %v1202
          %v1204 = vrot.slane %v1201, 4
          %v1205 = vadd.f32 %v1201, %v1204
          %v1206 = vrot.slane %v1205, 2
          %v1207 = vadd.f32 %v1205, %v1206
          %v1208 = vrot.slane %v1207, 1
          %v1209 = vadd.f32 %v1207, %v1208
          %v1210 = vadd.f32 %v1203, %v1209
          %v1211 = vmul.f32 %v1201, %v664
          %v1212 = vld [vmem:[#allocation6] sm:$0x1]
          %v1213 = vmul.f32 %v1188, %v1212
          %v1214 = vrot.slane %v1211, 4
          %v1215 = vadd.f32 %v1211, %v1214
          %v1216 = vrot.slane %v1215, 2
          %v1217 = vadd.f32 %v1215, %v1216
          %v1218 = vrot.slane %v1217, 1
          %v1219 = vadd.f32 %v1217, %v1218
          %v1220 = vadd.f32 %v1213, %v1219
          %v1221 = vld [vmem:[#allocation7] sm:$0x1]
          %v1222 = vmul.f32 %v1188, %v1221
          %v1223 = vmul.f32 %v1211, %v664
          %v1224 = vrot.slane %v1223, 4
          %v1225 = vadd.f32 %v1223, %v1224
          %v1226 = vrot.slane %v1225, 2
          %v1227 = vadd.f32 %v1225, %v1226
          %v1228 = vrot.slane %v1227, 1
          %v1229 = vadd.f32 %v1227, %v1228
          %v1230 = vadd.f32 %v1222, %v1229
          %1231 = vst [vmem:[#allocation4] sm:$0x1] %v1185
          %1232 = vst [vmem:[#allocation5] sm:$0x1] %v1210
          %1233 = vst [vmem:[#allocation6] sm:$0x1] %v1220
          %1234 = vst [vmem:[#allocation7] sm:$0x1] %v1230
          %p1235 = scmp.eq.s32.totalorder %s42, 2
          // Predicated region
          $region125: #{tpu_custom_call.1} parent=123 // pred_check
            %p1236 = pneg %p1235
          $region126: #{tpu_custom_call.1} parent=123 // pred_check_branch
            %1238 = sbr.rel (%p1236) target = $region128
          $region127: #{tpu_custom_call.1} parent=123 // pred_region
            %v1239 = vrcp.pop %v1210
            %v1240 = vmul.f32 %v1220, %v1239
            %v1241 = vmul.f32 %v1230, %v1239
            %v1242 = vmul.f32 %v1240, %v1240
            %v1243 = vsub.f32 %v1241, %v1242
            %v1244 = vmax.f32 %v1243, 1e-12
            %v1245 = vrsqrt.pop %v1244
            %v1246 = vmul.f32 %v1244, %v1245
            %vm1247 = vcmp.eq.f32.partialorder %v1244, inf
            %v1248 = vsel %vm1247, %v1244, %v1246
            %vm1249 = vcmp.eq.f32.partialorder %v1244, 0.0
            %v1250 = vand.u32 %v1244, 2147483648
            %v1251 = vsel %vm1249, %v1250, %v1248
            %v1252 = vld [vmem:[%s11] sm:$0x3]
            %v1253 = vld [vmem:[%s12] sm:$0x3]
            %vm1254 = vcmask 1040384
            %v1255 = vsel %vm1254, %v1240, 0.0
            %v1256 = vsel %vm1254, %v1251, 0.0
            %v1257 = vadd.f32 %v1255, %v1256
            %1258 = vadd.xlane.f32.xlu0 %v1257
            %v1259 = vpop.xlane.xlu0 %1258
            %v1260 = vrcp.pop 256.0
            %v1261 = vmul.f32 %v1259, %v1260
            %v1262 = vsub.f32 %v1240, %v1261
            %v1263 = vsub.f32 %v1251, %v1261
            %v1264 = vmul.f32 %v1262, %v1262
            %v1265 = vmul.f32 %v1263, %v1263
            %v1266 = vsel %vm1254, %v1264, 0.0
            %v1267 = vsel %vm1254, %v1265, 0.0
            %v1268 = vadd.f32 %v1266, %v1267
            %1269 = vadd.xlane.f32.xlu0 %v1268
            %v1270 = vpop.xlane.xlu0 %1269
            %v1271 = vmul.f32 %v1270, %v1260
            %v1272 = vadd.f32 %v1271, 1e-05
            %v1273 = vrsqrt.pop %v1272
            %v1274 = vmul.f32 %v1262, %v1273
            %v1275 = vmul.f32 %v1263, %v1273
            %v1277 = vlaneseq
            %v1278 = vshrl.u32 %v1277, 7
            %v1279 = vsub.s32 0, %v1278
            %v1280 = vrot.slane %v1252, %v1279
            %v1281 = vlaneseq
            %v1282 = vshrl.u32 %v1281, 7
            %v1283 = vsub.s32 1, %v1282
            %v1284 = vrot.slane %v1252, %v1283
            %v1287 = vmul.f32 %v1274, %v1280
            %v1288 = vmul.f32 %v1275, %v1284
            %v1290 = vlaneseq
            %v1291 = vshrl.u32 %v1290, 7
            %v1292 = vsub.s32 0, %v1291
            %v1293 = vrot.slane %v1253, %v1292
            %v1294 = vlaneseq
            %v1295 = vshrl.u32 %v1294, 7
            %v1296 = vsub.s32 1, %v1295
            %v1297 = vrot.slane %v1253, %v1296
            %v1300 = vadd.f32 %v1287, %v1293
            %v1301 = vadd.f32 %v1288, %v1297
            %v1302 = vld [vmem:[#allocation19] sm:$0xff]
            %v1303 = vld [vmem:[#allocation19 + $0x8] sm:$0xff]
            %v1304 = vld [vmem:[#allocation19 + $0x10] sm:$0xff]
            %v1305 = vld [vmem:[#allocation19 + $0x18] sm:$0xff]
            %v1306 = vld [vmem:[#allocation19 + $0x20] sm:$0xff]
            %v1307 = vld [vmem:[#allocation19 + $0x28] sm:$0xff]
            %v1308 = vld [vmem:[#allocation19 + $0x30] sm:$0xff]
            %v1309 = vld [vmem:[#allocation19 + $0x38] sm:$0xff]
            %v1310 = vld [vmem:[#allocation19 + $0x40] sm:$0xff]
            %v1311 = vld [vmem:[#allocation19 + $0x48] sm:$0xff]
            %v1312 = vld [vmem:[#allocation19 + $0x50] sm:$0xff]
            %v1313 = vld [vmem:[#allocation19 + $0x58] sm:$0xff]
            %v1314 = vld [vmem:[#allocation19 + $0x60] sm:$0xff]
            %v1315 = vld [vmem:[#allocation19 + $0x68] sm:$0xff]
            %v1316 = vld [vmem:[#allocation19 + $0x70] sm:$0xff]
            %v1317 = vld [vmem:[#allocation19 + $0x78] sm:$0xff]
            %v1318 = vld [vmem:[#allocation19 + $0x80] sm:$0xff]
            %v1319 = vld [vmem:[#allocation19 + $0x88] sm:$0xff]
            %v1320 = vld [vmem:[#allocation19 + $0x90] sm:$0xff]
            %v1321 = vld [vmem:[#allocation19 + $0x98] sm:$0xff]
            %v1322 = vld [vmem:[#allocation19 + $0xa0] sm:$0xff]
            %v1323 = vld [vmem:[#allocation19 + $0xa8] sm:$0xff]
            %v1324 = vld [vmem:[#allocation19 + $0xb0] sm:$0xff]
            %v1325 = vld [vmem:[#allocation19 + $0xb8] sm:$0xff]
            %v1326 = vld [vmem:[#allocation19 + $0xc0] sm:$0xff]
            %v1327 = vld [vmem:[#allocation19 + $0xc8] sm:$0xff]
            %v1328 = vld [vmem:[#allocation19 + $0xd0] sm:$0xff]
            %v1329 = vld [vmem:[#allocation19 + $0xd8] sm:$0xff]
            %v1330 = vld [vmem:[#allocation19 + $0xe0] sm:$0xff]
            %v1331 = vld [vmem:[#allocation19 + $0xe8] sm:$0xff]
            %v1332 = vld [vmem:[#allocation19 + $0xf0] sm:$0xff]
            %v1333 = vld [vmem:[#allocation19 + $0xf8] sm:$0xff]
            %v1334 = vld [vmem:[%s14] sm:$0x1]
            %1335 = vmatprep.subr.mxu0 0.0
            %1336 = vmatpush1.msra.mxu0 %v1317
            %1337 = vmatprep.subr.mxu0 0.0
            %1338 = vmatpush1.msra.mxu0 %v1316
            %1339 = vmatprep.subr.mxu0 0.0
            %1340 = vmatpush1.msra.mxu0 %v1315
            %1341 = vmatprep.subr.mxu0 0.0
            %1342 = vmatpush1.msra.mxu0 %v1314
            %1343 = vmatprep.subr.mxu0 0.0
            %1344 = vmatpush1.msra.mxu0 %v1313
            %1345 = vmatprep.subr.mxu0 0.0
            %1346 = vmatpush1.msra.mxu0 %v1312
            %1347 = vmatprep.subr.mxu0 0.0
            %1348 = vmatpush1.msra.mxu0 %v1311
            %1349 = vmatprep.subr.mxu0 0.0
            %1350 = vmatpush1.msra.mxu0 %v1310
            %1351 = vmatprep.subr.mxu0 0.0
            %1352 = vmatpush1.msra.mxu0 %v1309
            %1353 = vmatprep.subr.mxu0 0.0
            %1354 = vmatpush1.msra.mxu0 %v1308
            %1355 = vmatprep.subr.mxu0 0.0
            %1356 = vmatpush1.msra.mxu0 %v1307
            %1357 = vmatprep.subr.mxu0 0.0
            %1358 = vmatpush1.msra.mxu0 %v1306
            %1359 = vmatprep.subr.mxu0 0.0
            %1360 = vmatpush1.msra.mxu0 %v1305
            %1361 = vmatprep.subr.mxu0 0.0
            %1362 = vmatpush1.msra.mxu0 %v1304
            %1363 = vmatprep.subr.mxu0 0.0
            %1364 = vmatpush1.msra.mxu0 %v1303
            %1365 = vmatprep.subr.mxu0 0.0
            %1366 = vmatpush1.msra.mxu0 %v1302
            %1367 = vmatprep.subr.mxu0 0.0
            %1368 = vmatpush2.msra.mxu0 %v1333
            %1369 = vmatprep.subr.mxu0 0.0
            %1370 = vmatpush2.msra.mxu0 %v1332
            %1371 = vmatprep.subr.mxu0 0.0
            %1372 = vmatpush2.msra.mxu0 %v1331
            %1373 = vmatprep.subr.mxu0 0.0
            %1374 = vmatpush2.msra.mxu0 %v1330
            %1375 = vmatprep.subr.mxu0 0.0
            %1376 = vmatpush2.msra.mxu0 %v1329
            %1377 = vmatprep.subr.mxu0 0.0
            %1378 = vmatpush2.msra.mxu0 %v1328
            %1379 = vmatprep.subr.mxu0 0.0
            %1380 = vmatpush2.msra.mxu0 %v1327
            %1381 = vmatprep.subr.mxu0 0.0
            %1382 = vmatpush2.msra.mxu0 %v1326
            %1383 = vmatprep.subr.mxu0 0.0
            %1384 = vmatpush2.msra.mxu0 %v1325
            %1385 = vmatprep.subr.mxu0 0.0
            %1386 = vmatpush2.msra.mxu0 %v1324
            %1387 = vmatprep.subr.mxu0 0.0
            %1388 = vmatpush2.msra.mxu0 %v1323
            %1389 = vmatprep.subr.mxu0 0.0
            %1390 = vmatpush2.msra.mxu0 %v1322
            %1391 = vmatprep.subr.mxu0 0.0
            %1392 = vmatpush2.msra.mxu0 %v1321
            %1393 = vmatprep.subr.mxu0 0.0
            %1394 = vmatpush2.msra.mxu0 %v1320
            %1395 = vmatprep.subr.mxu0 0.0
            %1396 = vmatpush2.msra.mxu0 %v1319
            %1397 = vmatprep.subr.mxu0 0.0
            %1398 = vmatpush2.msra.mxu0 %v1318
            %1399 = vmatprep.mubr.f32.mxu0 %v1301
            %1400 = vmatmul.mubr.f32.gmra.mxu0 %v1300
            %v1401 = vpop.f32.mrf.mxu0
            %v1402 = vadd.f32 %v1334, %v1401
            %v1403 = vpop.f32.mrf.mxu0
            %1404 = vdwg.mxu0
            %1405 = vst [vmem:[%s616] sm:$0x1] %v1402
          $region128: #{tpu_custom_call.1} parent=123 // pred_fallthru
            _
        $region124: #{tpu_custom_call.1} parent=79 // pred_fallthru
          _
        %s1406 = sand.u32 %s384, 1
        %s1407 = scalar_lea.sflag [#allocation10], %s1406
        %s1408 = sand.u32 %s384, 1
        %s1409 = scalar_lea.vmem [#allocation20], %s1408
        // Predicated region
        $region129: #{tpu_custom_call.1} parent=79 // pred_check
          %p1410 = pneg %p394
        $region130: #{tpu_custom_call.1} parent=79 // pred_check_branch
          %1412 = sbr.rel (%p1410) target = $region132
        $region131: #{tpu_custom_call.1} parent=79 // pred_region
          %s1414 = ssub.s32 16, 16
          %1415 = vsyncadd %s1407, %s1414
          %s1416 = smul.addr %s40, 16
          %s1417 = scalar_lea.hbm %s15, %s1416
          %s1419 = sshll.u32 %s1409, 4
          %s1420 = int_to_ptr.vmem [resolvable:$true] %s1419
          %1422 = dma.vmem_to_hbm [thread:$0]  %s1420, 16, %s1417, %s1407
        $region132: #{tpu_custom_call.1} parent=79 // pred_fallthru
          _
      $region80: #{tpu_custom_call.1} parent=5 // pred_fallthru
        _
      %p1423 = scmp.le.s32.totalorder 2, %s30
      // Predicated region
      $region133: #{tpu_custom_call.1} parent=5 // pred_check
        %p1424 = pneg %p1423
      $region134: #{tpu_custom_call.1} parent=5 // pred_check_branch
        %1426 = sbr.rel (%p1424) target = $region136
      $region135: #{tpu_custom_call.1} parent=5 // pred_region
        %s1427 = ssub.s32 %s30, 2
        // Predicated region
        $region137: #{tpu_custom_call.1} parent=135 // pred_check
          %p1428 = pneg %p400
        $region138: #{tpu_custom_call.1} parent=135 // pred_check_branch
          %1430 = sbr.rel (%p1428) target = $region140
        $region139: #{tpu_custom_call.1} parent=135 // pred_region
          %s1431 = sand.u32 %s385, 1
          %s1432 = scalar_lea.sflag [#allocation10], %s1431
          %s1433 = sand.u32 %s385, 1
          %s1434 = scalar_lea.vmem [#allocation20], %s1433
          %1435 = dma.done %s1432, 16
        $region140: #{tpu_custom_call.1} parent=135 // pred_fallthru
          _
      $region136: #{tpu_custom_call.1} parent=5 // pred_fallthru
        _
    $region6: #{tpu_custom_call.1} parent=1 // loop_footer
      %s34 = sadd.s32 1, %s30
    $region7: #{tpu_custom_call.1} parent=1 // loop_footer_branch
      %29 = sbr.rel target = $region3
    $region8: #{tpu_custom_call.1} parent=1 // loop_exit
      _
    %1436 = vsyncpa [#allocation9], 1
    %s1437 = scalar_lea.sflag [#allocation9], 1
    %1438 = vsyncpa %s1437, 1
    %1439 = vsyncpa [#allocation12], 1
    %1440 = vsyncpa [#allocation15], 1
    %1441 = vsyncpa [#allocation18], 1
    %1442 = vsyncpa [#allocation10], 1
    %s1443 = scalar_lea.sflag [#allocation10], 1
    %1444 = vsyncpa %s1443, 1

</llo_original>
